<compile_context>
chip_gen: v7x
topology: tpu7x:2x2x1
jax: 0.10.0
libtpu: 0.0.40
codegen_flags: <defaults>
</compile_context>

<pallas_src>
import functools

import jax
import jax.numpy as jnp
from jax import lax
from jax.experimental import pallas as pl
from jax.experimental.pallas import tpu as pltpu

M = 0.15        # circle-loss margin  (module default)
GAMMA = 1.0     # circle-loss scale   (module default)
EPS = 1e-12     # F.normalize epsilon
_LANES = 128    # lane-dense output width


def _softplus(x):
    # torch.nn.functional.softplus (beta=1), numerically stable
    return jnp.maximum(x, 0.0) + jnp.log1p(jnp.exp(-jnp.abs(x)))


def _logsumexp_last(x):
    # logsumexp over last dim, keepdims=True
    mx = jnp.max(x, axis=-1, keepdims=True)
    return mx + jnp.log(jnp.sum(jnp.exp(x - mx), axis=-1, keepdims=True))


def _dot_and_inv_norm(a, cand):
    """Raw anchor·candidate dot products and candidate inverse L2 norms.

    a: (tb, D) raw dtype; cand: (tb, K, D) raw dtype.
    Returns (raw_dot (tb,K) f32, inv_norm (tb,K) f32). Normalization is folded
    into the small result instead of materializing normalized candidate copies.
    """
    D = a.shape[-1]
    c32 = cand.astype(jnp.float32)
    sumsq = jnp.sum(c32 * c32, axis=-1)                    # (tb, K)
    inv_c = lax.rsqrt(jnp.maximum(sumsq, EPS * EPS))       # == 1/max(||c||, EPS)
    if D >= 128:
        # MXU path: feed raw (possibly bf16) operands, accumulate in f32.
        raw = jnp.einsum(
            "bqd,bkd->bqk", a[:, None, :], cand,
            preferred_element_type=jnp.float32)[:, 0, :]
    else:
        # Small-D VPU path (broadcast-multiply + lane reduce).
        raw = jnp.sum(a.astype(jnp.float32)[:, None, :] * c32, axis=-1)
    return raw, inv_c


def _circle_loss_kernel(negw_ref, a_ref, p_ref, n_ref, pw_ref, out_ref):
    negw = negw_ref[0]                          # mean(pos_weights), SMEM scalar

    a = a_ref[...]                              # (tb, D)
    pw = pw_ref[...].astype(jnp.float32)        # (tb, P)

    a32 = a.astype(jnp.float32)
    inv_a = lax.rsqrt(jnp.maximum(jnp.sum(a32 * a32, axis=-1, keepdims=True),
                                  EPS * EPS))   # (tb, 1)

    sp_raw, inv_p = _dot_and_inv_norm(a, p_ref[...])       # (tb, P)
    sn_raw, inv_n = _dot_and_inv_norm(a, n_ref[...])       # (tb, N)

    sp = sp_raw * inv_a * inv_p                 # cosine similarities
    sn = sn_raw * inv_a * inv_n

    # positive branch (detach only affects gradients; forward value identical)
    ap = jnp.maximum(1.0 + M - sp, 0.0)
    logit_p = -ap * (sp - (1.0 - M)) * GAMMA * pw
    lse_p = _logsumexp_last(logit_p)            # (tb, 1)

    # negative branch
    an = jnp.maximum(sn + M, 0.0)
    logit_n = an * (sn - M) * GAMMA * negw
    lse_n = _logsumexp_last(logit_n)            # (tb, 1)

    val = _softplus(lse_p + lse_n)              # (tb, 1) per-row loss
    # lane-dense unmasked store; wrapper reads column 0
    out_ref[...] = jnp.broadcast_to(val, out_ref.shape).astype(out_ref.dtype)


def _pick_block_b(B, per_row_bytes, budget_bytes=8 << 20):
    """Largest legal batch tile whose double-buffered working set fits budget."""
    if 2 * B * per_row_bytes <= budget_bytes:
        return B                                # whole batch in one block
    for tb in (512, 256, 128, 64, 32, 16, 8):   # multiples of 8 (sublane rule)
        if B % tb == 0 and 2 * tb * per_row_bytes <= budget_bytes:
            return tb
    # TODO(synk): B not divisible by 8 and too large for one block -> no tiling.
    return B


@functools.partial(jax.jit, static_argnames=("block_b",))
def circle_loss3(anchor, pos, neg, pos_weights, *, block_b=None):
    B, D = anchor.shape
    _, P, _ = pos.shape
    _, N, _ = neg.shape

    itemsize = anchor.dtype.itemsize
    per_row_bytes = itemsize * (D + P * D + N * D) + 4 * P + 4 * _LANES
    tb = block_b if block_b is not None else _pick_block_b(B, per_row_bytes)
    assert B % tb == 0, (B, tb)
    grid_b = B // tb

    # Global reduction precomputed outside the kernel (would break B-tiling).
    neg_w = jnp.mean(pos_weights).astype(jnp.float32).reshape(1)

    bytes_accessed = (anchor.size * itemsize + pos.size * itemsize
                      + neg.size * itemsize
                      + pos_weights.size * pos_weights.dtype.itemsize
                      + B * _LANES * 4)
    cost = pl.CostEstimate(
        flops=4 * B * (P + N) * D,
        transcendentals=B * (2 * (P + N) + 8),
        bytes_accessed=bytes_accessed,
    )

    out = pl.pallas_call(
        _circle_loss_kernel,
        out_shape=jax.ShapeDtypeStruct((B, _LANES), jnp.float32),
        grid_spec=pltpu.PrefetchScalarGridSpec(
            num_scalar_prefetch=0,
            grid=(grid_b,),
            in_specs=[
                pl.BlockSpec(memory_space=pltpu.MemorySpace.SMEM),   # neg_w
                pl.BlockSpec((tb, D), lambda i: (i, 0)),             # anchor
                pl.BlockSpec((tb, P, D), lambda i: (i, 0, 0)),       # pos
                pl.BlockSpec((tb, N, D), lambda i: (i, 0, 0)),       # neg
                pl.BlockSpec((tb, P), lambda i: (i, 0)),             # pos_weights
            ],
            out_specs=pl.BlockSpec((tb, _LANES), lambda i: (i, 0)),
        ),
        compiler_params=pltpu.CompilerParams(
            dimension_semantics=("parallel",),
            vmem_limit_bytes=32 * 1024 * 1024,
        ),
        cost_estimate=cost,
    )(neg_w, anchor, pos, neg, pos_weights)

    return jnp.mean(out[:, 0])


def _reference(anchor, pos, neg, pos_weights):
    # pure-JAX reference of the PyTorch forward (cosine metric)
    def norm(x):
        return x / jnp.maximum(jnp.linalg.norm(x, axis=-1, keepdims=True), EPS)
    a_n, p_n, n_n = norm(anchor), norm(pos), norm(neg)
    sp = jnp.einsum("bd,bpd->bp", a_n, p_n)
    sn = jnp.einsum("bd,bnd->bn", a_n, n_n)
    ap = jnp.maximum(-sp + 1.0 + M, 0.0)
    logit_p = -ap * (sp - (1.0 - M)) * GAMMA * pos_weights
    lse_p = jax.scipy.special.logsumexp(logit_p, axis=-1)
    an = jnp.maximum(sn + M, 0.0)
    logit_n = an * (sn - M) * GAMMA * jnp.mean(pos_weights)
    lse_n = jax.scipy.special.logsumexp(logit_n, axis=-1)
    return jnp.mean(jax.nn.softplus(lse_p + lse_n))


if __name__ == "__main__":
    B, P, N, D = 16, 8, 16, 32
    key = jax.random.PRNGKey(0)
    k1, k2, k3, k4 = jax.random.split(key, 4)
    anchor = jax.random.normal(k1, (B, D), dtype=jnp.float32)
    pos = jax.random.normal(k2, (B, P, D), dtype=jnp.float32)
    neg = jax.random.normal(k3, (B, N, D), dtype=jnp.float32)
    pos_weights = jax.random.uniform(k4, (B, P), dtype=jnp.float32,
                                     minval=0.5, maxval=1.5)

    # Force block_b=8 so the B-tiled, pipelined path (grid=(2,)) is exercised.
    loss = circle_loss3(anchor, pos, neg, pos_weights, block_b=8)
    jax.block_until_ready(loss)

    ref = _reference(anchor, pos, neg, pos_weights)
    assert jnp.allclose(loss, ref, atol=1e-5, rtol=1e-5), (loss, ref)

    # Auto-tiled path (single block at this toy size) must agree too.
    loss_auto = circle_loss3(anchor, pos, neg, pos_weights)
    jax.block_until_ready(loss_auto)
    assert jnp.allclose(loss_auto, ref, atol=1e-5, rtol=1e-5), (loss_auto, ref)

    print("KERNEL_OK")
</pallas_src>

<mosaic_0001>
module attributes {stable_mosaic.version = 11 : i64} {
  func.func @_circle_loss_kernel(%arg0: i32, %arg1: memref<1xf32, #tpu.memory_space<smem>>, %arg2: memref<8x32xf32, #tpu.memory_space<vmem>>, %arg3: memref<8x8x32xf32, #tpu.memory_space<vmem>>, %arg4: memref<8x16x32xf32, #tpu.memory_space<vmem>>, %arg5: memref<8x8xf32, #tpu.memory_space<vmem>>, %arg6: memref<8x128xf32, #tpu.memory_space<vmem>>) attributes {dimension_semantics = [#tpu.dimension_semantics<parallel>], iteration_bounds = array<i64: 2>, scalar_prefetch = 0 : i64, scratch_operands = 0 : i64, tpu.core_type = #tpu.core_type<tc>, window_params = [{transform_indices = @transform_0, window_bounds = array<i64: 1>}, {transform_indices = @transform_1, window_bounds = array<i64: 8, 32>}, {transform_indices = @transform_2, window_bounds = array<i64: 8, 8, 32>}, {transform_indices = @transform_3, window_bounds = array<i64: 8, 16, 32>}, {transform_indices = @transform_4, window_bounds = array<i64: 8, 8>}, {transform_indices = @transform_5, window_bounds = array<i64: 8, 128>}]} {
    %c0 = arith.constant 0 : index
    %0 = memref.load %arg1[%c0] : memref<1xf32, #tpu.memory_space<smem>>
    %c0_0 = arith.constant 0 : index
    %c0_1 = arith.constant 0 : index
    %1 = vector.load %arg2[%c0_0, %c0_1] : memref<8x32xf32, #tpu.memory_space<vmem>>, vector<8x32xf32>
    %c0_2 = arith.constant 0 : index
    %c0_3 = arith.constant 0 : index
    %2 = vector.load %arg5[%c0_2, %c0_3] : memref<8x8xf32, #tpu.memory_space<vmem>>, vector<8x8xf32>
    %3 = arith.mulf %1, %1 : vector<8x32xf32>
    %cst = arith.constant dense<0.000000e+00> : vector<8xf32>
    %4 = vector.multi_reduction <add>, %3, %cst [1] : vector<8x32xf32> to vector<8xf32>
    %5 = vector.shape_cast %4 : vector<8xf32> to vector<8x1xf32>
    %cst_4 = arith.constant 1.000000e-24 : f32
    %6 = vector.broadcast %cst_4 : f32 to vector<8x1xf32>
    %7 = arith.maximumf %5, %6 : vector<8x1xf32>
    %8 = math.rsqrt %7 : vector<8x1xf32>
    %c0_5 = arith.constant 0 : index
    %c0_6 = arith.constant 0 : index
    %c0_7 = arith.constant 0 : index
    %9 = vector.load %arg3[%c0_5, %c0_6, %c0_7] : memref<8x8x32xf32, #tpu.memory_space<vmem>>, vector<8x8x32xf32>
    %10 = arith.mulf %9, %9 : vector<8x8x32xf32>
    %cst_8 = arith.constant dense<0.000000e+00> : vector<8x8xf32>
    %11 = vector.multi_reduction <add>, %10, %cst_8 [2] : vector<8x8x32xf32> to vector<8x8xf32>
    %cst_9 = arith.constant 1.000000e-24 : f32
    %12 = vector.broadcast %cst_9 : f32 to vector<8x8xf32>
    %13 = arith.maximumf %11, %12 : vector<8x8xf32>
    %14 = math.rsqrt %13 : vector<8x8xf32>
    %15 = vector.shape_cast %1 : vector<8x32xf32> to vector<8x1x32xf32>
    %16 = vector.broadcast %15 : vector<8x1x32xf32> to vector<8x8x32xf32>
    %17 = arith.mulf %16, %9 : vector<8x8x32xf32>
    %cst_10 = arith.constant dense<0.000000e+00> : vector<8x8xf32>
    %18 = vector.multi_reduction <add>, %17, %cst_10 [2] : vector<8x8x32xf32> to vector<8x8xf32>
    %c0_11 = arith.constant 0 : index
    %c0_12 = arith.constant 0 : index
    %c0_13 = arith.constant 0 : index
    %19 = vector.load %arg4[%c0_11, %c0_12, %c0_13] : memref<8x16x32xf32, #tpu.memory_space<vmem>>, vector<8x16x32xf32>
    %20 = arith.mulf %19, %19 : vector<8x16x32xf32>
    %cst_14 = arith.constant dense<0.000000e+00> : vector<8x16xf32>
    %21 = vector.multi_reduction <add>, %20, %cst_14 [2] : vector<8x16x32xf32> to vector<8x16xf32>
    %cst_15 = arith.constant 1.000000e-24 : f32
    %22 = vector.broadcast %cst_15 : f32 to vector<8x16xf32>
    %23 = arith.maximumf %21, %22 : vector<8x16xf32>
    %24 = math.rsqrt %23 : vector<8x16xf32>
    %25 = vector.shape_cast %1 : vector<8x32xf32> to vector<8x1x32xf32>
    %26 = vector.broadcast %25 : vector<8x1x32xf32> to vector<8x16x32xf32>
    %27 = arith.mulf %26, %19 : vector<8x16x32xf32>
    %cst_16 = arith.constant dense<0.000000e+00> : vector<8x16xf32>
    %28 = vector.multi_reduction <add>, %27, %cst_16 [2] : vector<8x16x32xf32> to vector<8x16xf32>
    %29 = vector.broadcast %8 : vector<8x1xf32> to vector<8x8xf32>
    %30 = arith.mulf %18, %29 : vector<8x8xf32>
    %31 = arith.mulf %30, %14 : vector<8x8xf32>
    %32 = vector.broadcast %8 : vector<8x1xf32> to vector<8x16xf32>
    %33 = arith.mulf %28, %32 : vector<8x16xf32>
    %34 = arith.mulf %33, %24 : vector<8x16xf32>
    %cst_17 = arith.constant 1.150000e+00 : f32
    %35 = vector.broadcast %cst_17 : f32 to vector<8x8xf32>
    %36 = arith.subf %35, %31 : vector<8x8xf32>
    %cst_18 = arith.constant 0.000000e+00 : f32
    %37 = vector.broadcast %cst_18 : f32 to vector<8x8xf32>
    %38 = arith.maximumf %36, %37 : vector<8x8xf32>
    %cst_19 = arith.constant 0.000000e+00 : f32
    %39 = vector.broadcast %cst_19 : f32 to vector<8x8xf32>
    %40 = arith.subf %39, %38 : vector<8x8xf32>
    %cst_20 = arith.constant 8.500000e-01 : f32
    %41 = vector.broadcast %cst_20 : f32 to vector<8x8xf32>
    %42 = arith.subf %31, %41 : vector<8x8xf32>
    %43 = arith.mulf %40, %42 : vector<8x8xf32>
    %cst_21 = arith.constant 1.000000e+00 : f32
    %44 = vector.broadcast %cst_21 : f32 to vector<8x8xf32>
    %45 = arith.mulf %43, %44 : vector<8x8xf32>
    %46 = arith.mulf %45, %2 : vector<8x8xf32>
    %cst_22 = arith.constant dense<0xFF800000> : vector<8xf32>
    %47 = vector.multi_reduction <maximumf>, %46, %cst_22 [1] : vector<8x8xf32> to vector<8xf32>
    %48 = vector.shape_cast %47 : vector<8xf32> to vector<8x1xf32>
    %49 = vector.broadcast %48 : vector<8x1xf32> to vector<8x8xf32>
    %50 = arith.subf %46, %49 : vector<8x8xf32>
    %51 = math.exp %50 : vector<8x8xf32>
    %cst_23 = arith.constant dense<0.000000e+00> : vector<8xf32>
    %52 = vector.multi_reduction <add>, %51, %cst_23 [1] : vector<8x8xf32> to vector<8xf32>
    %53 = vector.shape_cast %52 : vector<8xf32> to vector<8x1xf32>
    %54 = math.log %53 : vector<8x1xf32>
    %55 = arith.addf %48, %54 : vector<8x1xf32>
    %cst_24 = arith.constant 1.500000e-01 : f32
    %56 = vector.broadcast %cst_24 : f32 to vector<8x16xf32>
    %57 = arith.addf %34, %56 : vector<8x16xf32>
    %cst_25 = arith.constant 0.000000e+00 : f32
    %58 = vector.broadcast %cst_25 : f32 to vector<8x16xf32>
    %59 = arith.maximumf %57, %58 : vector<8x16xf32>
    %cst_26 = arith.constant 1.500000e-01 : f32
    %60 = vector.broadcast %cst_26 : f32 to vector<8x16xf32>
    %61 = arith.subf %34, %60 : vector<8x16xf32>
    %62 = arith.mulf %59, %61 : vector<8x16xf32>
    %cst_27 = arith.constant 1.000000e+00 : f32
    %63 = vector.broadcast %cst_27 : f32 to vector<8x16xf32>
    %64 = arith.mulf %62, %63 : vector<8x16xf32>
    %65 = vector.broadcast %0 : f32 to vector<8x16xf32>
    %66 = arith.mulf %64, %65 : vector<8x16xf32>
    %cst_28 = arith.constant dense<0xFF800000> : vector<8xf32>
    %67 = vector.multi_reduction <maximumf>, %66, %cst_28 [1] : vector<8x16xf32> to vector<8xf32>
    %68 = vector.shape_cast %67 : vector<8xf32> to vector<8x1xf32>
    %69 = vector.broadcast %68 : vector<8x1xf32> to vector<8x16xf32>
    %70 = arith.subf %66, %69 : vector<8x16xf32>
    %71 = math.exp %70 : vector<8x16xf32>
    %cst_29 = arith.constant dense<0.000000e+00> : vector<8xf32>
    %72 = vector.multi_reduction <add>, %71, %cst_29 [1] : vector<8x16xf32> to vector<8xf32>
    %73 = vector.shape_cast %72 : vector<8xf32> to vector<8x1xf32>
    %74 = math.log %73 : vector<8x1xf32>
    %75 = arith.addf %68, %74 : vector<8x1xf32>
    %76 = arith.addf %55, %75 : vector<8x1xf32>
    %cst_30 = arith.constant 0.000000e+00 : f32
    %77 = vector.broadcast %cst_30 : f32 to vector<8x1xf32>
    %78 = arith.maximumf %76, %77 : vector<8x1xf32>
    %79 = math.absf %76 : vector<8x1xf32>
    %cst_31 = arith.constant 0.000000e+00 : f32
    %80 = vector.broadcast %cst_31 : f32 to vector<8x1xf32>
    %81 = arith.subf %80, %79 : vector<8x1xf32>
    %82 = math.exp %81 : vector<8x1xf32>
    %83 = math.log1p %82 : vector<8x1xf32>
    %84 = arith.addf %78, %83 : vector<8x1xf32>
    %85 = vector.shape_cast %84 : vector<8x1xf32> to vector<8x1xf32>
    %86 = vector.broadcast %85 : vector<8x1xf32> to vector<8x128xf32>
    %c0_32 = arith.constant 0 : index
    %c0_33 = arith.constant 0 : index
    %87 = vector.load %arg6[%c0_32, %c0_33] : memref<8x128xf32, #tpu.memory_space<vmem>>, vector<8x128xf32>
    tpu.vector_store %arg6[%c0_32, %c0_33], %86 {strides = array<i32>} : memref<8x128xf32, #tpu.memory_space<vmem>>, vector<8x128xf32>,
    return
  }
  func.func @transform_0(%arg0: i32) -> i32 {
    %c0_i32 = arith.constant 0 : i32
    %c0_i32_0 = arith.constant 0 : i32
    return %c0_i32 : i32
  }
  func.func @transform_1(%arg0: i32) -> (i32, i32) {
    %c0_i32 = arith.constant 0 : i32
    %c0_i32_0 = arith.constant 0 : i32
    return %arg0, %c0_i32 : i32, i32
  }
  func.func @transform_2(%arg0: i32) -> (i32, i32, i32) {
    %c0_i32 = arith.constant 0 : i32
    %c0_i32_0 = arith.constant 0 : i32
    %c0_i32_1 = arith.constant 0 : i32
    return %arg0, %c0_i32, %c0_i32_0 : i32, i32, i32
  }
  func.func @transform_3(%arg0: i32) -> (i32, i32, i32) {
    %c0_i32 = arith.constant 0 : i32
    %c0_i32_0 = arith.constant 0 : i32
    %c0_i32_1 = arith.constant 0 : i32
    return %arg0, %c0_i32, %c0_i32_0 : i32, i32, i32
  }
  func.func @transform_4(%arg0: i32) -> (i32, i32) {
    %c0_i32 = arith.constant 0 : i32
    %c0_i32_0 = arith.constant 0 : i32
    return %arg0, %c0_i32 : i32, i32
  }
  func.func @transform_5(%arg0: i32) -> (i32, i32) {
    %c0_i32 = arith.constant 0 : i32
    %c0_i32_0 = arith.constant 0 : i32
    return %arg0, %c0_i32 : i32, i32
  }
}

</mosaic_0001>

<llo_original>
// kernel: circle_loss3.1
$region0: #{circle_loss3.1}
  #allocation0 [shape = 'u32[]', space=smem, size = 0x4, offset = 0x4, fixed_abs, tag = 'smem constant byte address 0x4 - core index']
  #allocation1 [shape = 'u32[144,128]{1,0:T(1,128)}', space=vmem, size = 0x12000, scoped, tag = 'internal scratch']
  #allocation2 [shape = 'f32[1]{0:T(128)S(6)}', space=smem, size = 0x200, scoped, tag = 'scoped memory for circle_loss3.1']
  %s0 = inlined_call_operand.<no memory space> [shape: f32[1], index: 0, kind: input, shape index: {}]
  %s1 = inlined_call_operand.vmem [shape: f32[16,32], index: 1, kind: input, shape index: {}]
  %s2 = inlined_call_operand.hbm [shape: f32[16,8,32], index: 2, kind: input, shape index: {}]
  %s3 = inlined_call_operand.hbm [shape: f32[16,16,32], index: 3, kind: input, shape index: {}]
  %s4 = inlined_call_operand.vmem [shape: f32[16,8], index: 4, kind: input, shape index: {}]
  %s5 = inlined_call_operand.vmem [shape: f32[16,128], index: 5, kind: output, shape index: {}]
  %s6 = sld [smem:[#allocation0]]
  $region61: #{circle_loss3.1} parent=0
    _
  %s8 = ssub.s32 1, %s6
  %s9 = scalar_select 0, %s8, %s6
  %10 = sst [smem:[#allocation2]] %s0
  $region1: #{circle_loss3.1} parent=0
    #allocation3 [shape = 'u8[65536]{0}', space=vmem, size = 0x10000, scoped, tag = 'input window, operand 2']
    #allocation4 [shape = 's32[2]{0}', space=sflag, size = 0x8, scoped, tag = 'scoped memory for circle_loss3.1']
    #allocation5 [shape = 'u8[131072]{0}', space=vmem, size = 0x20000, scoped, tag = 'input window, operand 3']
    #allocation6 [shape = 's32[2]{0}', space=sflag, size = 0x8, scoped, tag = 'scoped memory for circle_loss3.1']
    %11 = vsyncpa [#allocation4], 0
    %s12 = scalar_lea.sflag [#allocation4], 1
    %13 = vsyncpa %s12, 0
    %14 = vsyncpa [#allocation6], 0
    %s15 = scalar_lea.sflag [#allocation6], 1
    %16 = vsyncpa %s15, 0
    loop: start=0, step=1, limit=4
    $region2: #{circle_loss3.1} parent=1 // loop_pre_header
      _
    $region3: #{circle_loss3.1} parent=1 // loop_header
      %s18 = sphi 0, %s22
      %p19 = scmp.ge.s32.totalorder %s18, 4
      %s26 = sphi 0, %s26
      %s28 = sphi 0, %s26
      %s29 = sphi 0, %s28
      %s43 = sphi 0, %s29
      %s49 = sphi 0, %s51
      %s52 = sphi 0, %s49
      %s53 = sphi 0, %s52
      %s69 = sphi 0, %s53
      %s75 = sphi 0, %s77
      %s78 = sphi 0, %s75
      %s79 = sphi 0, %s78
      %s95 = sphi 0, %s79
      %s101 = sphi 0, %s103
      %s104 = sphi 0, %s101
      %s105 = sphi 0, %s104
      %s121 = sphi 0, %s105
      %s127 = sphi 0, %s129
      %s130 = sphi 0, %s127
      %s131 = sphi 0, %s130
      %s147 = sphi 0, %s131
      %s153 = sphi 0, %s155
      %s156 = sphi 0, %s153
      %s157 = sphi 0, %s156
      %s173 = sphi 0, %s157
    $region4: #{circle_loss3.1} parent=1 // loop_header_branch
      %21 = sbr.rel (%p19) target = $region8
    $region5: #{circle_loss3.1} parent=1 // loop_body
      %s23 = ssub.s32 %s18, 1
      %s24 = ssub.s32 %s18, 2
      %s25 = sadd.s32 %s18, 1
      %s27 = sadd.s32 %s26, 1
      %p30 = scmp.eq.s32.totalorder %s18, 1
      %p31 = scmp.ne.s32.totalorder %s26, %s28
      %p32 = scmp.eq.s32.totalorder %s18, 0
      %p33 = por %p31, %p32
      %p34 = scmp.ne.s32.totalorder %s26, %s28
      %p35 = scmp.eq.s32.totalorder %s23, 1
      %p36 = por %p34, %p35
      %p37 = scmp.ne.s32.totalorder %s28, %s29
      %p38 = scmp.eq.s32.totalorder %s23, 0
      %p39 = por %p37, %p38
      %p40 = scmp.ne.s32.totalorder %s28, %s29
      %p41 = scmp.eq.s32.totalorder %s24, 1
      %p42 = por %p40, %p41
      %p44 = scmp.ne.s32.totalorder %s29, %s43
      %p45 = scmp.eq.s32.totalorder %s24, 0
      %p46 = por %p44, %p45
      %s47 = ssub.s32 %s18, %s25
      %p48 = scmp.eq.s32.totalorder %s47, 0
      %s50 = sadd.s32 %s49, 1
      %s51 = scalar_select %p48, %s49, %s50
      %p54 = pneg %p48
      %p55 = scmp.eq.s32.totalorder %s18, 1
      %p56 = por %p54, %p55
      %p57 = scmp.ne.s32.totalorder %s49, %s52
      %p58 = scmp.eq.s32.totalorder %s18, 0
      %p59 = por %p57, %p58
      %p60 = scmp.ne.s32.totalorder %s49, %s52
      %p61 = scmp.eq.s32.totalorder %s23, 1
      %p62 = por %p60, %p61
      %p63 = scmp.ne.s32.totalorder %s52, %s53
      %p64 = scmp.eq.s32.totalorder %s23, 0
      %p65 = por %p63, %p64
      %p66 = scmp.ne.s32.totalorder %s52, %s53
      %p67 = scmp.eq.s32.totalorder %s24, 1
      %p68 = por %p66, %p67
      %p70 = scmp.ne.s32.totalorder %s53, %s69
      %p71 = scmp.eq.s32.totalorder %s24, 0
      %p72 = por %p70, %p71
      %s73 = ssub.s32 %s18, %s25
      %p74 = scmp.eq.s32.totalorder %s73, 0
      %s76 = sadd.s32 %s75, 1
      %s77 = scalar_select %p74, %s75, %s76
      %p80 = pneg %p74
      %p81 = scmp.eq.s32.totalorder %s18, 1
      %p82 = por %p80, %p81
      %p83 = scmp.ne.s32.totalorder %s75, %s78
      %p84 = scmp.eq.s32.totalorder %s18, 0
      %p85 = por %p83, %p84
      %p86 = scmp.ne.s32.totalorder %s75, %s78
      %p87 = scmp.eq.s32.totalorder %s23, 1
      %p88 = por %p86, %p87
      %p89 = scmp.ne.s32.totalorder %s78, %s79
      %p90 = scmp.eq.s32.totalorder %s23, 0
      %p91 = por %p89, %p90
      %p92 = scmp.ne.s32.totalorder %s78, %s79
      %p93 = scmp.eq.s32.totalorder %s24, 1
      %p94 = por %p92, %p93
      %p96 = scmp.ne.s32.totalorder %s79, %s95
      %p97 = scmp.eq.s32.totalorder %s24, 0
      %p98 = por %p96, %p97
      %s99 = ssub.s32 %s18, %s25
      %p100 = scmp.eq.s32.totalorder %s99, 0
      %s102 = sadd.s32 %s101, 1
      %s103 = scalar_select %p100, %s101, %s102
      %p106 = pneg %p100
      %p107 = scmp.eq.s32.totalorder %s18, 1
      %p108 = por %p106, %p107
      %p109 = scmp.ne.s32.totalorder %s101, %s104
      %p110 = scmp.eq.s32.totalorder %s18, 0
      %p111 = por %p109, %p110
      %p112 = scmp.ne.s32.totalorder %s101, %s104
      %p113 = scmp.eq.s32.totalorder %s23, 1
      %p114 = por %p112, %p113
      %p115 = scmp.ne.s32.totalorder %s104, %s105
      %p116 = scmp.eq.s32.totalorder %s23, 0
      %p117 = por %p115, %p116
      %p118 = scmp.ne.s32.totalorder %s104, %s105
      %p119 = scmp.eq.s32.totalorder %s24, 1
      %p120 = por %p118, %p119
      %p122 = scmp.ne.s32.totalorder %s105, %s121
      %p123 = scmp.eq.s32.totalorder %s24, 0
      %p124 = por %p122, %p123
      %s125 = ssub.s32 %s18, %s25
      %p126 = scmp.eq.s32.totalorder %s125, 0
      %s128 = sadd.s32 %s127, 1
      %s129 = scalar_select %p126, %s127, %s128
      %p132 = pneg %p126
      %p133 = scmp.eq.s32.totalorder %s18, 1
      %p134 = por %p132, %p133
      %p135 = scmp.ne.s32.totalorder %s127, %s130
      %p136 = scmp.eq.s32.totalorder %s18, 0
      %p137 = por %p135, %p136
      %p138 = scmp.ne.s32.totalorder %s127, %s130
      %p139 = scmp.eq.s32.totalorder %s23, 1
      %p140 = por %p138, %p139
      %p141 = scmp.ne.s32.totalorder %s130, %s131
      %p142 = scmp.eq.s32.totalorder %s23, 0
      %p143 = por %p141, %p142
      %p144 = scmp.ne.s32.totalorder %s130, %s131
      %p145 = scmp.eq.s32.totalorder %s24, 1
      %p146 = por %p144, %p145
      %p148 = scmp.ne.s32.totalorder %s131, %s147
      %p149 = scmp.eq.s32.totalorder %s24, 0
      %p150 = por %p148, %p149
      %s151 = ssub.s32 %s18, %s25
      %p152 = scmp.eq.s32.totalorder %s151, 0
      %s154 = sadd.s32 %s153, 1
      %s155 = scalar_select %p152, %s153, %s154
      %p158 = pneg %p152
      %p159 = scmp.eq.s32.totalorder %s18, 1
      %p160 = por %p158, %p159
      %p161 = scmp.ne.s32.totalorder %s153, %s156
      %p162 = scmp.eq.s32.totalorder %s18, 0
      %p163 = por %p161, %p162
      %p164 = scmp.ne.s32.totalorder %s153, %s156
      %p165 = scmp.eq.s32.totalorder %s23, 1
      %p166 = por %p164, %p165
      %p167 = scmp.ne.s32.totalorder %s156, %s157
      %p168 = scmp.eq.s32.totalorder %s23, 0
      %p169 = por %p167, %p168
      %p170 = scmp.ne.s32.totalorder %s156, %s157
      %p171 = scmp.eq.s32.totalorder %s24, 1
      %p172 = por %p170, %p171
      %p174 = scmp.ne.s32.totalorder %s157, %s173
      %p175 = scmp.eq.s32.totalorder %s24, 0
      %p176 = por %p174, %p175
      %p177 = scmp.le.s32.totalorder 1, %s18
      %p178 = scmp.lt.s32.totalorder %s18, 3
      %p179 = pnand %p177, %p178
      %p180 = pneg %p179
      // Predicated region
      $region9: #{circle_loss3.1} parent=5 // pred_check
        _
      $region10: #{circle_loss3.1} parent=5 // pred_check_branch
        %182 = sbr.rel (%p179) target = $region12
      $region11: #{circle_loss3.1} parent=5 // pred_region
        %s183 = ssub.s32 %s18, 1
        // Predicated region
        $region13: #{circle_loss3.1} parent=11 // pred_check
          %p184 = pneg %p39
        $region14: #{circle_loss3.1} parent=11 // pred_check_branch
          %186 = sbr.rel (%p184) target = $region16
        $region15: #{circle_loss3.1} parent=11 // pred_region
          _
        $region16: #{circle_loss3.1} parent=11 // pred_fallthru
          _
      $region12: #{circle_loss3.1} parent=5 // pred_fallthru
        _
      %p187 = scmp.lt.s32.totalorder %s18, 2
      // Predicated region
      $region17: #{circle_loss3.1} parent=5 // pred_check
        %p188 = pneg %p187
      $region18: #{circle_loss3.1} parent=5 // pred_check_branch
        %190 = sbr.rel (%p188) target = $region20
      $region19: #{circle_loss3.1} parent=5 // pred_region
        // Predicated region
        $region21: #{circle_loss3.1} parent=19 // pred_check
          %p191 = pneg %p59
        $region22: #{circle_loss3.1} parent=19 // pred_check_branch
          %193 = sbr.rel (%p191) target = $region24
        $region23: #{circle_loss3.1} parent=19 // pred_region
          %p194 = scmp.lt.s32.totalorder %s18, 1
          %s195 = scalar_select %p194, %s18, 1
          %s196 = smul.addr %s195, 8
          %s197 = scalar_lea.vmem %s1, %s196
        $region24: #{circle_loss3.1} parent=19 // pred_fallthru
          _
        // Predicated region
        $region25: #{circle_loss3.1} parent=19 // pred_check
          %p198 = pneg %p85
        $region26: #{circle_loss3.1} parent=19 // pred_check_branch
          %200 = sbr.rel (%p198) target = $region28
        $region27: #{circle_loss3.1} parent=19 // pred_region
          %s201 = sand.u32 %s75, 1
          %s202 = scalar_lea.sflag [#allocation4], %s201
          %s203 = sand.u32 %s75, 1
          %s204 = smul.addr %s203, 64
          %s205 = scalar_lea.vmem [#allocation3], %s204
          %s206 = smul.u32 8, %s18
          %s208 = ssub.s32 1024, 1024
          %209 = vsyncadd %s202, %s208
          %s210 = smul.addr %s206, 128
          %s211 = scalar_lea.hbm %s2, %s210
          %s212 = sshll.u32 %s205, 4
          %s213 = int_to_ptr.vmem [resolvable:$true] %s212
          %218 = dma.hbm_to_vmem [thread:$0]  %s211, 1024, %s213, %s202, 128, 128, 8
        $region28: #{circle_loss3.1} parent=19 // pred_fallthru
          _
        // Predicated region
        $region29: #{circle_loss3.1} parent=19 // pred_check
          %p219 = pneg %p111
        $region30: #{circle_loss3.1} parent=19 // pred_check_branch
          %221 = sbr.rel (%p219) target = $region32
        $region31: #{circle_loss3.1} parent=19 // pred_region
          %s222 = sand.u32 %s101, 1
          %s223 = scalar_lea.sflag [#allocation6], %s222
          %s224 = sand.u32 %s101, 1
          %s225 = smul.addr %s224, 128
          %s226 = scalar_lea.vmem [#allocation5], %s225
          %s227 = smul.u32 8, %s18
          %s229 = ssub.s32 2048, 2048
          %230 = vsyncadd %s223, %s229
          %s231 = smul.addr %s227, 2
          %s232 = smul.addr %s231, 128
          %s233 = scalar_lea.hbm %s3, %s232
          %s234 = sshll.u32 %s226, 4
          %s235 = int_to_ptr.vmem [resolvable:$true] %s234
          %240 = dma.hbm_to_vmem [thread:$0]  %s233, 2048, %s235, %s223, 128, 128, 8
        $region32: #{circle_loss3.1} parent=19 // pred_fallthru
          _
        // Predicated region
        $region33: #{circle_loss3.1} parent=19 // pred_check
          %p241 = pneg %p137
        $region34: #{circle_loss3.1} parent=19 // pred_check_branch
          %243 = sbr.rel (%p241) target = $region36
        $region35: #{circle_loss3.1} parent=19 // pred_region
          %p244 = scmp.lt.s32.totalorder %s18, 1
          %s245 = scalar_select %p244, %s18, 1
          %s246 = smul.addr %s245, 8
          %s247 = scalar_lea.vmem %s4, %s246
        $region36: #{circle_loss3.1} parent=19 // pred_fallthru
          _
      $region20: #{circle_loss3.1} parent=5 // pred_fallthru
        _
      %p248 = scmp.le.s32.totalorder 1, %s18
      %p249 = scmp.lt.s32.totalorder %s18, 3
      %p250 = pnand %p248, %p249
      %p251 = pneg %p250
      // Predicated region
      $region37: #{circle_loss3.1} parent=5 // pred_check
        _
      $region38: #{circle_loss3.1} parent=5 // pred_check_branch
        %253 = sbr.rel (%p250) target = $region40
      $region39: #{circle_loss3.1} parent=5 // pred_region
        %s254 = ssub.s32 %s18, 1
        %s255 = sand.u32 %s78, 1
        %s256 = scalar_lea.sflag [#allocation4], %s255
        %s257 = sand.u32 %s78, 1
        %s258 = smul.addr %s257, 64
        %s259 = scalar_lea.vmem [#allocation3], %s258
        // Predicated region
        $region41: #{circle_loss3.1} parent=39 // pred_check
          %p260 = pneg %p91
        $region42: #{circle_loss3.1} parent=39 // pred_check_branch
          %262 = sbr.rel (%p260) target = $region44
        $region43: #{circle_loss3.1} parent=39 // pred_region
          %263 = dma.done %s256, 1024
        $region44: #{circle_loss3.1} parent=39 // pred_fallthru
          _
        %s264 = sand.u32 %s104, 1
        %s265 = scalar_lea.sflag [#allocation6], %s264
        %s266 = sand.u32 %s104, 1
        %s267 = smul.addr %s266, 128
        %s268 = scalar_lea.vmem [#allocation5], %s267
        // Predicated region
        $region45: #{circle_loss3.1} parent=39 // pred_check
          %p269 = pneg %p117
        $region46: #{circle_loss3.1} parent=39 // pred_check_branch
          %271 = sbr.rel (%p269) target = $region48
        $region47: #{circle_loss3.1} parent=39 // pred_region
          %272 = dma.done %s265, 2048
        $region48: #{circle_loss3.1} parent=39 // pred_fallthru
          _
        %p273 = pneg %p39
        %p274 = pneg %p36
        %p275 = scmp.lt.s32.totalorder %s23, 1
        %s276 = scalar_select %p275, %s23, 1
        %s277 = smul.addr %s276, 8
        %s278 = scalar_lea.vmem %s1, %s277
        %p279 = pneg %p65
        %p280 = pneg %p62
        %s281 = sand.u32 %s78, 1
        %s282 = scalar_lea.sflag [#allocation4], %s281
        %s283 = sand.u32 %s78, 1
        %s284 = smul.addr %s283, 64
        %s285 = scalar_lea.vmem [#allocation3], %s284
        %p286 = pneg %p91
        %p287 = pneg %p88
        %s288 = sand.u32 %s104, 1
        %s289 = scalar_lea.sflag [#allocation6], %s288
        %s290 = sand.u32 %s104, 1
        %s291 = smul.addr %s290, 128
        %s292 = scalar_lea.vmem [#allocation5], %s291
        %p293 = pneg %p117
        %p294 = pneg %p114
        %p295 = scmp.lt.s32.totalorder %s23, 1
        %s296 = scalar_select %p295, %s23, 1
        %s297 = smul.addr %s296, 8
        %s298 = scalar_lea.vmem %s4, %s297
        %p299 = pneg %p143
        %p300 = pneg %p140
        %p301 = pneg %p169
        %p302 = pneg %p166
        %p303 = scmp.lt.s32.totalorder %s23, 1
        %s304 = scalar_select %p303, %s23, 1
        %s305 = smul.addr %s304, 8
        %s306 = scalar_lea.vmem %s5, %s305
        %p307 = scmp.lt.s32.totalorder %s23, 1
        %s308 = scalar_select %p307, %s23, 1
        %s309 = smul.addr %s308, 8
        %s310 = scalar_lea.vmem %s1, %s309
        %s311 = smul.u32 8, %s23
        %s312 = smul.u32 8, %s23
        %p313 = scmp.lt.s32.totalorder %s23, 1
        %s314 = scalar_select %p313, %s23, 1
        %s315 = smul.addr %s314, 8
        %s316 = scalar_lea.vmem %s4, %s315
        %p317 = scmp.lt.s32.totalorder %s23, 1
        %s318 = scalar_select %p317, %s23, 1
        %s319 = smul.addr %s318, 8
        %s320 = scalar_lea.vmem %s5, %s319
        %s321 = sld [smem:[#allocation2]]
        %v322 = vld [vmem:[%s310] sm:$0xff]
        %v323 = vld [vmem:[%s316] sm:$0xff]
        %v324 = vmul.f32 %v322, %v322
        %vm325 = vcmask 261120
        %v326 = vsel %vm325, %v324, 0.0
        %327 = vadd.xlane.f32.xlu0 %v326
        %v328 = vpop.xlane.xlu0 %327
        %v329 = vmax.f32 %v328, 1e-24
        %v330 = vrsqrt.pop %v329
        %v331 = vld [vmem:[%s259] sm:$0xff]
        %v332 = vld [vmem:[%s259 + $0x8] sm:$0xff]
        %v333 = vld [vmem:[%s259 + $0x10] sm:$0xff]
        %v334 = vld [vmem:[%s259 + $0x18] sm:$0xff]
        %v335 = vld [vmem:[%s259 + $0x20] sm:$0xff]
        %v336 = vld [vmem:[%s259 + $0x28] sm:$0xff]
        %v337 = vld [vmem:[%s259 + $0x30] sm:$0xff]
        %v338 = vld [vmem:[%s259 + $0x38] sm:$0xff]
        %v339 = vmul.f32 %v331, %v331
        %v340 = vmul.f32 %v332, %v332
        %v341 = vmul.f32 %v333, %v333
        %v342 = vmul.f32 %v334, %v334
        %v343 = vmul.f32 %v335, %v335
        %v344 = vmul.f32 %v336, %v336
        %v345 = vmul.f32 %v337, %v337
        %v346 = vmul.f32 %v338, %v338
        %v347 = vsel %vm325, %v339, 0.0
        %348 = vadd.xlane.f32.xlu0 %v347
        %v349 = vpop.xlane.xlu0 %348
        %v350 = vsel %vm325, %v340, 0.0
        %351 = vadd.xlane.f32.xlu0 %v350
        %v352 = vpop.xlane.xlu0 %351
        %v353 = vsel %vm325, %v341, 0.0
        %354 = vadd.xlane.f32.xlu0 %v353
        %v355 = vpop.xlane.xlu0 %354
        %v356 = vsel %vm325, %v342, 0.0
        %357 = vadd.xlane.f32.xlu0 %v356
        %v358 = vpop.xlane.xlu0 %357
        %v359 = vsel %vm325, %v343, 0.0
        %360 = vadd.xlane.f32.xlu0 %v359
        %v361 = vpop.xlane.xlu0 %360
        %v362 = vsel %vm325, %v344, 0.0
        %363 = vadd.xlane.f32.xlu0 %v362
        %v364 = vpop.xlane.xlu0 %363
        %v365 = vsel %vm325, %v345, 0.0
        %366 = vadd.xlane.f32.xlu0 %v365
        %v367 = vpop.xlane.xlu0 %366
        %v368 = vsel %vm325, %v346, 0.0
        %369 = vadd.xlane.f32.xlu0 %v368
        %v370 = vpop.xlane.xlu0 %369
        %v371 = vmax.f32 %v349, 1e-24
        %v372 = vmax.f32 %v352, 1e-24
        %v373 = vmax.f32 %v355, 1e-24
        %v374 = vmax.f32 %v358, 1e-24
        %v375 = vmax.f32 %v361, 1e-24
        %v376 = vmax.f32 %v364, 1e-24
        %v377 = vmax.f32 %v367, 1e-24
        %v378 = vmax.f32 %v370, 1e-24
        %v379 = vrsqrt.pop %v371
        %v380 = vrsqrt.pop %v372
        %v381 = vrsqrt.pop %v373
        %v382 = vrsqrt.pop %v374
        %v383 = vrsqrt.pop %v375
        %v384 = vrsqrt.pop %v376
        %v385 = vrsqrt.pop %v377
        %v386 = vrsqrt.pop %v378
        %v388 = vcombine.high %v322, %v322
        %v390 = vunpack.c.l.s4 1966171168
        %v391 = vunpack.c.0.s8 %v390
        %v392 = vlaneseq
        %v393 = vshrl.u32 %v392, 7
        %v394 = vsub.s32 %v391, %v393
        %v395 = vrot.slane %v322, %v394
        %v397 = vunpack.c.l.s4 1966171168
        %v398 = vunpack.c.0.s8 %v397
        %v399 = vlaneseq
        %v400 = vshrl.u32 %v399, 7
        %v401 = vsub.s32 %v398, %v400
        %v402 = vrot.slane %v388, %v401
        %v403 = vcombine.high %v395, %v395
        %v404 = vcombine.high %v402, %v402
        %v406 = vunpack.c.l.s4 1966171168
        %v407 = vunpack.c.0.s8 %v406
        %v408 = vlaneseq
        %v409 = vshrl.u32 %v408, 7
        %v410 = vsub.s32 %v407, %v409
        %v411 = vrot.slane %v395, %v410
        %v413 = vunpack.c.l.s4 1966171168
        %v414 = vunpack.c.0.s8 %v413
        %v415 = vlaneseq
        %v416 = vshrl.u32 %v415, 7
        %v417 = vsub.s32 %v414, %v416
        %v418 = vrot.slane %v402, %v417
        %v420 = vunpack.c.l.s4 1966171168
        %v421 = vunpack.c.0.s8 %v420
        %v422 = vlaneseq
        %v423 = vshrl.u32 %v422, 7
        %v424 = vsub.s32 %v421, %v423
        %v425 = vrot.slane %v403, %v424
        %v427 = vunpack.c.l.s4 1966171168
        %v428 = vunpack.c.0.s8 %v427
        %v429 = vlaneseq
        %v430 = vshrl.u32 %v429, 7
        %v431 = vsub.s32 %v428, %v430
        %v432 = vrot.slane %v404, %v431
        %v433 = vcombine.high %v411, %v411
        %v434 = vcombine.high %v418, %v418
        %v435 = vcombine.high %v425, %v425
        %v436 = vcombine.high %v432, %v432
        %v437 = vlaneseq
        %v438 = vshrl.u32 %v437, 7
        %v439 = vsub.s32 0, %v438
        %v440 = vrot.slane %v411, %v439
        %v441 = vlaneseq
        %v442 = vshrl.u32 %v441, 7
        %v443 = vsub.s32 0, %v442
        %v444 = vrot.slane %v425, %v443
        %v445 = vlaneseq
        %v446 = vshrl.u32 %v445, 7
        %v447 = vsub.s32 0, %v446
        %v448 = vrot.slane %v433, %v447
        %v449 = vlaneseq
        %v450 = vshrl.u32 %v449, 7
        %v451 = vsub.s32 0, %v450
        %v452 = vrot.slane %v435, %v451
        %v453 = vlaneseq
        %v454 = vshrl.u32 %v453, 7
        %v455 = vsub.s32 0, %v454
        %v456 = vrot.slane %v418, %v455
        %v457 = vlaneseq
        %v458 = vshrl.u32 %v457, 7
        %v459 = vsub.s32 0, %v458
        %v460 = vrot.slane %v432, %v459
        %v461 = vlaneseq
        %v462 = vshrl.u32 %v461, 7
        %v463 = vsub.s32 0, %v462
        %v464 = vrot.slane %v434, %v463
        %v465 = vlaneseq
        %v466 = vshrl.u32 %v465, 7
        %v467 = vsub.s32 0, %v466
        %v468 = vrot.slane %v436, %v467
        %v477 = vmul.f32 %v440, %v331
        %v478 = vmul.f32 %v444, %v332
        %v479 = vmul.f32 %v448, %v333
        %v480 = vmul.f32 %v452, %v334
        %v481 = vmul.f32 %v456, %v335
        %v482 = vmul.f32 %v460, %v336
        %v483 = vmul.f32 %v464, %v337
        %v484 = vmul.f32 %v468, %v338
        %v485 = vsel %vm325, %v477, 0.0
        %486 = vadd.xlane.f32.xlu0 %v485
        %v487 = vpop.xlane.xlu0 %486
        %v488 = vsel %vm325, %v478, 0.0
        %489 = vadd.xlane.f32.xlu0 %v488
        %v490 = vpop.xlane.xlu0 %489
        %v491 = vsel %vm325, %v479, 0.0
        %492 = vadd.xlane.f32.xlu0 %v491
        %v493 = vpop.xlane.xlu0 %492
        %v494 = vsel %vm325, %v480, 0.0
        %495 = vadd.xlane.f32.xlu0 %v494
        %v496 = vpop.xlane.xlu0 %495
        %v497 = vsel %vm325, %v481, 0.0
        %498 = vadd.xlane.f32.xlu0 %v497
        %v499 = vpop.xlane.xlu0 %498
        %v500 = vsel %vm325, %v482, 0.0
        %501 = vadd.xlane.f32.xlu0 %v500
        %v502 = vpop.xlane.xlu0 %501
        %v503 = vsel %vm325, %v483, 0.0
        %504 = vadd.xlane.f32.xlu0 %v503
        %v505 = vpop.xlane.xlu0 %504
        %v506 = vsel %vm325, %v484, 0.0
        %507 = vadd.xlane.f32.xlu0 %v506
        %v508 = vpop.xlane.xlu0 %507
        %v509 = vld [vmem:[%s268] sm:$0xff]
        %v510 = vld [vmem:[%s268 + $0x8] sm:$0xff]
        %v511 = vld [vmem:[%s268 + $0x10] sm:$0xff]
        %v512 = vld [vmem:[%s268 + $0x18] sm:$0xff]
        %v513 = vld [vmem:[%s268 + $0x20] sm:$0xff]
        %v514 = vld [vmem:[%s268 + $0x28] sm:$0xff]
        %v515 = vld [vmem:[%s268 + $0x30] sm:$0xff]
        %v516 = vld [vmem:[%s268 + $0x38] sm:$0xff]
        %v517 = vld [vmem:[%s268 + $0x40] sm:$0xff]
        %v518 = vld [vmem:[%s268 + $0x48] sm:$0xff]
        %v519 = vld [vmem:[%s268 + $0x50] sm:$0xff]
        %v520 = vld [vmem:[%s268 + $0x58] sm:$0xff]
        %v521 = vld [vmem:[%s268 + $0x60] sm:$0xff]
        %v522 = vld [vmem:[%s268 + $0x68] sm:$0xff]
        %v523 = vld [vmem:[%s268 + $0x70] sm:$0xff]
        %v524 = vld [vmem:[%s268 + $0x78] sm:$0xff]
        %v525 = vmul.f32 %v509, %v509
        %v526 = vmul.f32 %v510, %v510
        %v527 = vmul.f32 %v511, %v511
        %v528 = vmul.f32 %v512, %v512
        %v529 = vmul.f32 %v513, %v513
        %v530 = vmul.f32 %v514, %v514
        %v531 = vmul.f32 %v515, %v515
        %v532 = vmul.f32 %v516, %v516
        %v533 = vmul.f32 %v517, %v517
        %v534 = vmul.f32 %v518, %v518
        %v535 = vmul.f32 %v519, %v519
        %v536 = vmul.f32 %v520, %v520
        %v537 = vmul.f32 %v521, %v521
        %v538 = vmul.f32 %v522, %v522
        %v539 = vmul.f32 %v523, %v523
        %v540 = vmul.f32 %v524, %v524
        %v541 = vsel %vm325, %v525, 0.0
        %542 = vadd.xlane.f32.xlu0 %v541
        %v543 = vpop.xlane.xlu0 %542
        %v544 = vsel %vm325, %v526, 0.0
        %545 = vadd.xlane.f32.xlu0 %v544
        %v546 = vpop.xlane.xlu0 %545
        %v547 = vsel %vm325, %v527, 0.0
        %548 = vadd.xlane.f32.xlu0 %v547
        %v549 = vpop.xlane.xlu0 %548
        %v550 = vsel %vm325, %v528, 0.0
        %551 = vadd.xlane.f32.xlu0 %v550
        %v552 = vpop.xlane.xlu0 %551
        %v553 = vsel %vm325, %v529, 0.0
        %554 = vadd.xlane.f32.xlu0 %v553
        %v555 = vpop.xlane.xlu0 %554
        %v556 = vsel %vm325, %v530, 0.0
        %557 = vadd.xlane.f32.xlu0 %v556
        %v558 = vpop.xlane.xlu0 %557
        %v559 = vsel %vm325, %v531, 0.0
        %560 = vadd.xlane.f32.xlu0 %v559
        %v561 = vpop.xlane.xlu0 %560
        %v562 = vsel %vm325, %v532, 0.0
        %563 = vadd.xlane.f32.xlu0 %v562
        %v564 = vpop.xlane.xlu0 %563
        %v565 = vsel %vm325, %v533, 0.0
        %566 = vadd.xlane.f32.xlu0 %v565
        %v567 = vpop.xlane.xlu0 %566
        %v568 = vsel %vm325, %v534, 0.0
        %569 = vadd.xlane.f32.xlu0 %v568
        %v570 = vpop.xlane.xlu0 %569
        %v571 = vsel %vm325, %v535, 0.0
        %572 = vadd.xlane.f32.xlu0 %v571
        %v573 = vpop.xlane.xlu0 %572
        %v574 = vsel %vm325, %v536, 0.0
        %575 = vadd.xlane.f32.xlu0 %v574
        %v576 = vpop.xlane.xlu0 %575
        %v577 = vsel %vm325, %v537, 0.0
        %578 = vadd.xlane.f32.xlu0 %v577
        %v579 = vpop.xlane.xlu0 %578
        %v580 = vsel %vm325, %v538, 0.0
        %581 = vadd.xlane.f32.xlu0 %v580
        %v582 = vpop.xlane.xlu0 %581
        %v583 = vsel %vm325, %v539, 0.0
        %584 = vadd.xlane.f32.xlu0 %v583
        %v585 = vpop.xlane.xlu0 %584
        %v586 = vsel %vm325, %v540, 0.0
        %587 = vadd.xlane.f32.xlu0 %v586
        %v588 = vpop.xlane.xlu0 %587
        %v589 = vmax.f32 %v543, 1e-24
        %v590 = vmax.f32 %v546, 1e-24
        %v591 = vmax.f32 %v549, 1e-24
        %v592 = vmax.f32 %v552, 1e-24
        %v593 = vmax.f32 %v555, 1e-24
        %v594 = vmax.f32 %v558, 1e-24
        %v595 = vmax.f32 %v561, 1e-24
        %v596 = vmax.f32 %v564, 1e-24
        %v597 = vmax.f32 %v567, 1e-24
        %v598 = vmax.f32 %v570, 1e-24
        %v599 = vmax.f32 %v573, 1e-24
        %v600 = vmax.f32 %v576, 1e-24
        %v601 = vmax.f32 %v579, 1e-24
        %v602 = vmax.f32 %v582, 1e-24
        %v603 = vmax.f32 %v585, 1e-24
        %v604 = vmax.f32 %v588, 1e-24
        %v605 = vrsqrt.pop %v589
        %v606 = vrsqrt.pop %v590
        %v607 = vrsqrt.pop %v591
        %v608 = vrsqrt.pop %v592
        %v609 = vrsqrt.pop %v593
        %v610 = vrsqrt.pop %v594
        %v611 = vrsqrt.pop %v595
        %v612 = vrsqrt.pop %v596
        %v613 = vrsqrt.pop %v597
        %v614 = vrsqrt.pop %v598
        %v615 = vrsqrt.pop %v599
        %v616 = vrsqrt.pop %v600
        %v617 = vrsqrt.pop %v601
        %v618 = vrsqrt.pop %v602
        %v619 = vrsqrt.pop %v603
        %v620 = vrsqrt.pop %v604
        %v621 = vmul.f32 %v440, %v509
        %v622 = vmul.f32 %v440, %v510
        %v623 = vmul.f32 %v444, %v511
        %v624 = vmul.f32 %v444, %v512
        %v625 = vmul.f32 %v448, %v513
        %v626 = vmul.f32 %v448, %v514
        %v627 = vmul.f32 %v452, %v515
        %v628 = vmul.f32 %v452, %v516
        %v629 = vmul.f32 %v456, %v517
        %v630 = vmul.f32 %v456, %v518
        %v631 = vmul.f32 %v460, %v519
        %v632 = vmul.f32 %v460, %v520
        %v633 = vmul.f32 %v464, %v521
        %v634 = vmul.f32 %v464, %v522
        %v635 = vmul.f32 %v468, %v523
        %v636 = vmul.f32 %v468, %v524
        %v637 = vsel %vm325, %v621, 0.0
        %638 = vadd.xlane.f32.xlu0 %v637
        %v639 = vpop.xlane.xlu0 %638
        %v640 = vsel %vm325, %v622, 0.0
        %641 = vadd.xlane.f32.xlu0 %v640
        %v642 = vpop.xlane.xlu0 %641
        %v643 = vsel %vm325, %v623, 0.0
        %644 = vadd.xlane.f32.xlu0 %v643
        %v645 = vpop.xlane.xlu0 %644
        %v646 = vsel %vm325, %v624, 0.0
        %647 = vadd.xlane.f32.xlu0 %v646
        %v648 = vpop.xlane.xlu0 %647
        %v649 = vsel %vm325, %v625, 0.0
        %650 = vadd.xlane.f32.xlu0 %v649
        %v651 = vpop.xlane.xlu0 %650
        %v652 = vsel %vm325, %v626, 0.0
        %653 = vadd.xlane.f32.xlu0 %v652
        %v654 = vpop.xlane.xlu0 %653
        %v655 = vsel %vm325, %v627, 0.0
        %656 = vadd.xlane.f32.xlu0 %v655
        %v657 = vpop.xlane.xlu0 %656
        %v658 = vsel %vm325, %v628, 0.0
        %659 = vadd.xlane.f32.xlu0 %v658
        %v660 = vpop.xlane.xlu0 %659
        %v661 = vsel %vm325, %v629, 0.0
        %662 = vadd.xlane.f32.xlu0 %v661
        %v663 = vpop.xlane.xlu0 %662
        %v664 = vsel %vm325, %v630, 0.0
        %665 = vadd.xlane.f32.xlu0 %v664
        %v666 = vpop.xlane.xlu0 %665
        %v667 = vsel %vm325, %v631, 0.0
        %668 = vadd.xlane.f32.xlu0 %v667
        %v669 = vpop.xlane.xlu0 %668
        %v670 = vsel %vm325, %v632, 0.0
        %671 = vadd.xlane.f32.xlu0 %v670
        %v672 = vpop.xlane.xlu0 %671
        %v673 = vsel %vm325, %v633, 0.0
        %674 = vadd.xlane.f32.xlu0 %v673
        %v675 = vpop.xlane.xlu0 %674
        %v676 = vsel %vm325, %v634, 0.0
        %677 = vadd.xlane.f32.xlu0 %v676
        %v678 = vpop.xlane.xlu0 %677
        %v679 = vsel %vm325, %v635, 0.0
        %680 = vadd.xlane.f32.xlu0 %v679
        %v681 = vpop.xlane.xlu0 %680
        %v682 = vsel %vm325, %v636, 0.0
        %683 = vadd.xlane.f32.xlu0 %v682
        %v684 = vpop.xlane.xlu0 %683
        %v686 = vlaneseq
        %v687 = vshrl.u32 %v686, 7
        %v688 = vsub.s32 0, %v687
        %v689 = vrot.slane %v330, %v688
        %v690 = vlaneseq
        %v691 = vshrl.u32 %v690, 7
        %v692 = vsub.s32 1, %v691
        %v693 = vrot.slane %v330, %v692
        %v694 = vlaneseq
        %v695 = vshrl.u32 %v694, 7
        %v696 = vsub.s32 2, %v695
        %v697 = vrot.slane %v330, %v696
        %v698 = vlaneseq
        %v699 = vshrl.u32 %v698, 7
        %v700 = vsub.s32 3, %v699
        %v701 = vrot.slane %v330, %v700
        %v702 = vlaneseq
        %v703 = vshrl.u32 %v702, 7
        %v704 = vsub.s32 4, %v703
        %v705 = vrot.slane %v330, %v704
        %v706 = vlaneseq
        %v707 = vshrl.u32 %v706, 7
        %v708 = vsub.s32 5, %v707
        %v709 = vrot.slane %v330, %v708
        %v710 = vlaneseq
        %v711 = vshrl.u32 %v710, 7
        %v712 = vsub.s32 6, %v711
        %v713 = vrot.slane %v330, %v712
        %v714 = vlaneseq
        %v715 = vshrl.u32 %v714, 7
        %v716 = vsub.s32 7, %v715
        %v717 = vrot.slane %v330, %v716
        %v726 = vmul.f32 %v487, %v689
        %v727 = vmul.f32 %v490, %v693
        %v728 = vmul.f32 %v493, %v697
        %v729 = vmul.f32 %v496, %v701
        %v730 = vmul.f32 %v499, %v705
        %v731 = vmul.f32 %v502, %v709
        %v732 = vmul.f32 %v505, %v713
        %v733 = vmul.f32 %v508, %v717
        %v734 = vmul.f32 %v726, %v379
        %v735 = vmul.f32 %v727, %v380
        %v736 = vmul.f32 %v728, %v381
        %v737 = vmul.f32 %v729, %v382
        %v738 = vmul.f32 %v730, %v383
        %v739 = vmul.f32 %v731, %v384
        %v740 = vmul.f32 %v732, %v385
        %v741 = vmul.f32 %v733, %v386
        %v742 = vmul.f32 %v639, %v689
        %v743 = vmul.f32 %v642, %v689
        %v744 = vmul.f32 %v645, %v693
        %v745 = vmul.f32 %v648, %v693
        %v746 = vmul.f32 %v651, %v697
        %v747 = vmul.f32 %v654, %v697
        %v748 = vmul.f32 %v657, %v701
        %v749 = vmul.f32 %v660, %v701
        %v750 = vmul.f32 %v663, %v705
        %v751 = vmul.f32 %v666, %v705
        %v752 = vmul.f32 %v669, %v709
        %v753 = vmul.f32 %v672, %v709
        %v754 = vmul.f32 %v675, %v713
        %v755 = vmul.f32 %v678, %v713
        %v756 = vmul.f32 %v681, %v717
        %v757 = vmul.f32 %v684, %v717
        %v758 = vmul.f32 %v742, %v605
        %v759 = vmul.f32 %v743, %v606
        %v760 = vmul.f32 %v744, %v607
        %v761 = vmul.f32 %v745, %v608
        %v762 = vmul.f32 %v746, %v609
        %v763 = vmul.f32 %v747, %v610
        %v764 = vmul.f32 %v748, %v611
        %v765 = vmul.f32 %v749, %v612
        %v766 = vmul.f32 %v750, %v613
        %v767 = vmul.f32 %v751, %v614
        %v768 = vmul.f32 %v752, %v615
        %v769 = vmul.f32 %v753, %v616
        %v770 = vmul.f32 %v754, %v617
        %v771 = vmul.f32 %v755, %v618
        %v772 = vmul.f32 %v756, %v619
        %v773 = vmul.f32 %v757, %v620
        %v774 = vsub.f32 1.15, %v734
        %v775 = vsub.f32 1.15, %v735
        %v776 = vsub.f32 1.15, %v736
        %v777 = vsub.f32 1.15, %v737
        %v778 = vsub.f32 1.15, %v738
        %v779 = vsub.f32 1.15, %v739
        %v780 = vsub.f32 1.15, %v740
        %v781 = vsub.f32 1.15, %v741
        %v782 = vmax.f32 %v774, 0.0
        %v783 = vmax.f32 %v775, 0.0
        %v784 = vmax.f32 %v776, 0.0
        %v785 = vmax.f32 %v777, 0.0
        %v786 = vmax.f32 %v778, 0.0
        %v787 = vmax.f32 %v779, 0.0
        %v788 = vmax.f32 %v780, 0.0
        %v789 = vmax.f32 %v781, 0.0
        %v790 = vsub.f32 0.0, %v782
        %v791 = vsub.f32 0.0, %v783
        %v792 = vsub.f32 0.0, %v784
        %v793 = vsub.f32 0.0, %v785
        %v794 = vsub.f32 0.0, %v786
        %v795 = vsub.f32 0.0, %v787
        %v796 = vsub.f32 0.0, %v788
        %v797 = vsub.f32 0.0, %v789
        %v798 = vsub.f32 %v734, 0.85
        %v799 = vsub.f32 %v735, 0.85
        %v800 = vsub.f32 %v736, 0.85
        %v801 = vsub.f32 %v737, 0.85
        %v802 = vsub.f32 %v738, 0.85
        %v803 = vsub.f32 %v739, 0.85
        %v804 = vsub.f32 %v740, 0.85
        %v805 = vsub.f32 %v741, 0.85
        %v806 = vmul.f32 %v790, %v798
        %v807 = vmul.f32 %v791, %v799
        %v808 = vmul.f32 %v792, %v800
        %v809 = vmul.f32 %v793, %v801
        %v810 = vmul.f32 %v794, %v802
        %v811 = vmul.f32 %v795, %v803
        %v812 = vmul.f32 %v796, %v804
        %v813 = vmul.f32 %v797, %v805
        %v815 = vlaneseq
        %v816 = vshrl.u32 %v815, 7
        %v817 = vsub.s32 0, %v816
        %v818 = vrot.slane %v323, %v817
        %820 = vbcast.lane.b32.xlu0 %v818, 256
        %v821 = vpop.permute.xlu0 %820
        %v822 = vlaneseq
        %v823 = vshrl.u32 %v822, 7
        %v824 = vsub.s32 1, %v823
        %v825 = vrot.slane %v323, %v824
        %827 = vbcast.lane.b32.xlu0 %v825, 256
        %v828 = vpop.permute.xlu0 %827
        %v829 = vlaneseq
        %v830 = vshrl.u32 %v829, 7
        %v831 = vsub.s32 2, %v830
        %v832 = vrot.slane %v323, %v831
        %834 = vbcast.lane.b32.xlu0 %v832, 256
        %v835 = vpop.permute.xlu0 %834
        %v836 = vlaneseq
        %v837 = vshrl.u32 %v836, 7
        %v838 = vsub.s32 3, %v837
        %v839 = vrot.slane %v323, %v838
        %841 = vbcast.lane.b32.xlu0 %v839, 256
        %v842 = vpop.permute.xlu0 %841
        %v843 = vlaneseq
        %v844 = vshrl.u32 %v843, 7
        %v845 = vsub.s32 4, %v844
        %v846 = vrot.slane %v323, %v845
        %848 = vbcast.lane.b32.xlu0 %v846, 256
        %v849 = vpop.permute.xlu0 %848
        %v850 = vlaneseq
        %v851 = vshrl.u32 %v850, 7
        %v852 = vsub.s32 5, %v851
        %v853 = vrot.slane %v323, %v852
        %855 = vbcast.lane.b32.xlu0 %v853, 256
        %v856 = vpop.permute.xlu0 %855
        %v857 = vlaneseq
        %v858 = vshrl.u32 %v857, 7
        %v859 = vsub.s32 6, %v858
        %v860 = vrot.slane %v323, %v859
        %862 = vbcast.lane.b32.xlu0 %v860, 256
        %v863 = vpop.permute.xlu0 %862
        %v864 = vlaneseq
        %v865 = vshrl.u32 %v864, 7
        %v866 = vsub.s32 7, %v865
        %v867 = vrot.slane %v323, %v866
        %869 = vbcast.lane.b32.xlu0 %v867, 256
        %v870 = vpop.permute.xlu0 %869
        %v879 = vmul.f32 %v806, %v821
        %v880 = vmul.f32 %v807, %v828
        %v881 = vmul.f32 %v808, %v835
        %v882 = vmul.f32 %v809, %v842
        %v883 = vmul.f32 %v810, %v849
        %v884 = vmul.f32 %v811, %v856
        %v885 = vmul.f32 %v812, %v863
        %v886 = vmul.f32 %v813, %v870
        %895 = vset.pattern.permute.xlu0 0
        %896 = vperm.xlu0 %895, %v879
        %v897 = vpop.permute.xlu0 %896
        %898 = vset.pattern.permute.xlu0 0
        %899 = vperm.xlu0 %898, %v880
        %v900 = vpop.permute.xlu0 %899
        %901 = vset.pattern.permute.xlu0 0
        %902 = vperm.xlu0 %901, %v881
        %v903 = vpop.permute.xlu0 %902
        %904 = vset.pattern.permute.xlu0 0
        %905 = vperm.xlu0 %904, %v882
        %v906 = vpop.permute.xlu0 %905
        %907 = vset.pattern.permute.xlu0 0
        %908 = vperm.xlu0 %907, %v883
        %v909 = vpop.permute.xlu0 %908
        %910 = vset.pattern.permute.xlu0 0
        %911 = vperm.xlu0 %910, %v884
        %v912 = vpop.permute.xlu0 %911
        %913 = vset.pattern.permute.xlu0 0
        %914 = vperm.xlu0 %913, %v885
        %v915 = vpop.permute.xlu0 %914
        %916 = vset.pattern.permute.xlu0 0
        %917 = vperm.xlu0 %916, %v886
        %v918 = vpop.permute.xlu0 %917
        %v919 = vlaneseq
        %v920 = vand.u32 %v919, 127
        %v921 = vlaneseq
        %v922 = vshrl.u32 %v921, 7
        %v923 = vsub.s32 %v920, %v922
        %v924 = vrot.slane %v897, %v923
        %v925 = vlaneseq
        %v926 = vshrl.u32 %v925, 7
        %v927 = vsub.s32 %v920, %v926
        %v928 = vrot.slane %v900, %v927
        %v929 = vlaneseq
        %v930 = vshrl.u32 %v929, 7
        %v931 = vsub.s32 %v920, %v930
        %v932 = vrot.slane %v903, %v931
        %v933 = vlaneseq
        %v934 = vshrl.u32 %v933, 7
        %v935 = vsub.s32 %v920, %v934
        %v936 = vrot.slane %v906, %v935
        %v937 = vlaneseq
        %v938 = vshrl.u32 %v937, 7
        %v939 = vsub.s32 %v920, %v938
        %v940 = vrot.slane %v909, %v939
        %v941 = vlaneseq
        %v942 = vshrl.u32 %v941, 7
        %v943 = vsub.s32 %v920, %v942
        %v944 = vrot.slane %v912, %v943
        %v945 = vlaneseq
        %v946 = vshrl.u32 %v945, 7
        %v947 = vsub.s32 %v920, %v946
        %v948 = vrot.slane %v915, %v947
        %v949 = vlaneseq
        %v950 = vshrl.u32 %v949, 7
        %v951 = vsub.s32 %v920, %v950
        %v952 = vrot.slane %v918, %v951
        %vm953 = vcmask 1041409
        %v954 = vsel %vm953, %v928, %v924
        %vm955 = vcmask 1042434
        %v956 = vsel %vm955, %v932, %v954
        %vm957 = vcmask 1043459
        %v958 = vsel %vm957, %v936, %v956
        %vm959 = vcmask 1044484
        %v960 = vsel %vm959, %v940, %v958
        %vm961 = vcmask 1045509
        %v962 = vsel %vm961, %v944, %v960
        %vm963 = vcmask 1046534
        %v964 = vsel %vm963, %v948, %v962
        %vm965 = vcmask 1047559
        %v966 = vsel %vm965, %v952, %v964
        %vm968 = vcmask 64512
        %v969 = vsel %vm968, %v966, -inf
        %970 = vmax.xlane.f32.xlu0 %v969
        %v971 = vpop.xlane.xlu0 %970
        %v973 = vlaneseq
        %v974 = vshrl.u32 %v973, 7
        %v975 = vsub.s32 0, %v974
        %v976 = vrot.slane %v971, %v975
        %v977 = vlaneseq
        %v978 = vshrl.u32 %v977, 7
        %v979 = vsub.s32 1, %v978
        %v980 = vrot.slane %v971, %v979
        %v981 = vlaneseq
        %v982 = vshrl.u32 %v981, 7
        %v983 = vsub.s32 2, %v982
        %v984 = vrot.slane %v971, %v983
        %v985 = vlaneseq
        %v986 = vshrl.u32 %v985, 7
        %v987 = vsub.s32 3, %v986
        %v988 = vrot.slane %v971, %v987
        %v989 = vlaneseq
        %v990 = vshrl.u32 %v989, 7
        %v991 = vsub.s32 4, %v990
        %v992 = vrot.slane %v971, %v991
        %v993 = vlaneseq
        %v994 = vshrl.u32 %v993, 7
        %v995 = vsub.s32 5, %v994
        %v996 = vrot.slane %v971, %v995
        %v997 = vlaneseq
        %v998 = vshrl.u32 %v997, 7
        %v999 = vsub.s32 6, %v998
        %v1000 = vrot.slane %v971, %v999
        %v1001 = vlaneseq
        %v1002 = vshrl.u32 %v1001, 7
        %v1003 = vsub.s32 7, %v1002
        %v1004 = vrot.slane %v971, %v1003
        %v1013 = vsub.f32 %v879, %v976
        %v1014 = vsub.f32 %v880, %v980
        %v1015 = vsub.f32 %v881, %v984
        %v1016 = vsub.f32 %v882, %v988
        %v1017 = vsub.f32 %v883, %v992
        %v1018 = vsub.f32 %v884, %v996
        %v1019 = vsub.f32 %v885, %v1000
        %v1020 = vsub.f32 %v886, %v1004
        %v1021 = vmul.f32 %v1013, 1.442695
        %v1022 = vpow.pop %v1021
        %v1023 = vmul.f32 %v1014, 1.442695
        %v1024 = vpow.pop %v1023
        %v1025 = vmul.f32 %v1015, 1.442695
        %v1026 = vpow.pop %v1025
        %v1027 = vmul.f32 %v1016, 1.442695
        %v1028 = vpow.pop %v1027
        %v1029 = vmul.f32 %v1017, 1.442695
        %v1030 = vpow.pop %v1029
        %v1031 = vmul.f32 %v1018, 1.442695
        %v1032 = vpow.pop %v1031
        %v1033 = vmul.f32 %v1019, 1.442695
        %v1034 = vpow.pop %v1033
        %v1035 = vmul.f32 %v1020, 1.442695
        %v1036 = vpow.pop %v1035
        %1045 = vset.pattern.permute.xlu0 0
        %1046 = vperm.xlu0 %1045, %v1022
        %v1047 = vpop.permute.xlu0 %1046
        %1048 = vset.pattern.permute.xlu0 0
        %1049 = vperm.xlu0 %1048, %v1024
        %v1050 = vpop.permute.xlu0 %1049
        %1051 = vset.pattern.permute.xlu0 0
        %1052 = vperm.xlu0 %1051, %v1026
        %v1053 = vpop.permute.xlu0 %1052
        %1054 = vset.pattern.permute.xlu0 0
        %1055 = vperm.xlu0 %1054, %v1028
        %v1056 = vpop.permute.xlu0 %1055
        %1057 = vset.pattern.permute.xlu0 0
        %1058 = vperm.xlu0 %1057, %v1030
        %v1059 = vpop.permute.xlu0 %1058
        %1060 = vset.pattern.permute.xlu0 0
        %1061 = vperm.xlu0 %1060, %v1032
        %v1062 = vpop.permute.xlu0 %1061
        %1063 = vset.pattern.permute.xlu0 0
        %1064 = vperm.xlu0 %1063, %v1034
        %v1065 = vpop.permute.xlu0 %1064
        %1066 = vset.pattern.permute.xlu0 0
        %1067 = vperm.xlu0 %1066, %v1036
        %v1068 = vpop.permute.xlu0 %1067
        %v1069 = vlaneseq
        %v1070 = vshrl.u32 %v1069, 7
        %v1071 = vsub.s32 %v920, %v1070
        %v1072 = vrot.slane %v1047, %v1071
        %v1073 = vlaneseq
        %v1074 = vshrl.u32 %v1073, 7
        %v1075 = vsub.s32 %v920, %v1074
        %v1076 = vrot.slane %v1050, %v1075
        %v1077 = vlaneseq
        %v1078 = vshrl.u32 %v1077, 7
        %v1079 = vsub.s32 %v920, %v1078
        %v1080 = vrot.slane %v1053, %v1079
        %v1081 = vlaneseq
        %v1082 = vshrl.u32 %v1081, 7
        %v1083 = vsub.s32 %v920, %v1082
        %v1084 = vrot.slane %v1056, %v1083
        %v1085 = vlaneseq
        %v1086 = vshrl.u32 %v1085, 7
        %v1087 = vsub.s32 %v920, %v1086
        %v1088 = vrot.slane %v1059, %v1087
        %v1089 = vlaneseq
        %v1090 = vshrl.u32 %v1089, 7
        %v1091 = vsub.s32 %v920, %v1090
        %v1092 = vrot.slane %v1062, %v1091
        %v1093 = vlaneseq
        %v1094 = vshrl.u32 %v1093, 7
        %v1095 = vsub.s32 %v920, %v1094
        %v1096 = vrot.slane %v1065, %v1095
        %v1097 = vlaneseq
        %v1098 = vshrl.u32 %v1097, 7
        %v1099 = vsub.s32 %v920, %v1098
        %v1100 = vrot.slane %v1068, %v1099
        %v1101 = vsel %vm953, %v1076, %v1072
        %v1102 = vsel %vm955, %v1080, %v1101
        %v1103 = vsel %vm957, %v1084, %v1102
        %v1104 = vsel %vm959, %v1088, %v1103
        %v1105 = vsel %vm961, %v1092, %v1104
        %v1106 = vsel %vm963, %v1096, %v1105
        %v1107 = vsel %vm965, %v1100, %v1106
        %v1109 = vsel %vm968, %v1107, 0.0
        %1110 = vadd.xlane.f32.xlu0 %v1109
        %v1111 = vpop.xlane.xlu0 %1110
        %v1112 = vlog2.pop %v1111
        %v1113 = vmul.f32 %v1112, 0.6931472
        %v1114 = vadd.f32 %v971, %v1113
        %v1115 = vadd.f32 %v758, 0.15
        %v1116 = vadd.f32 %v759, 0.15
        %v1117 = vadd.f32 %v760, 0.15
        %v1118 = vadd.f32 %v761, 0.15
        %v1119 = vadd.f32 %v762, 0.15
        %v1120 = vadd.f32 %v763, 0.15
        %v1121 = vadd.f32 %v764, 0.15
        %v1122 = vadd.f32 %v765, 0.15
        %v1123 = vadd.f32 %v766, 0.15
        %v1124 = vadd.f32 %v767, 0.15
        %v1125 = vadd.f32 %v768, 0.15
        %v1126 = vadd.f32 %v769, 0.15
        %v1127 = vadd.f32 %v770, 0.15
        %v1128 = vadd.f32 %v771, 0.15
        %v1129 = vadd.f32 %v772, 0.15
        %v1130 = vadd.f32 %v773, 0.15
        %v1131 = vmax.f32 %v1115, 0.0
        %v1132 = vmax.f32 %v1116, 0.0
        %v1133 = vmax.f32 %v1117, 0.0
        %v1134 = vmax.f32 %v1118, 0.0
        %v1135 = vmax.f32 %v1119, 0.0
        %v1136 = vmax.f32 %v1120, 0.0
        %v1137 = vmax.f32 %v1121, 0.0
        %v1138 = vmax.f32 %v1122, 0.0
        %v1139 = vmax.f32 %v1123, 0.0
        %v1140 = vmax.f32 %v1124, 0.0
        %v1141 = vmax.f32 %v1125, 0.0
        %v1142 = vmax.f32 %v1126, 0.0
        %v1143 = vmax.f32 %v1127, 0.0
        %v1144 = vmax.f32 %v1128, 0.0
        %v1145 = vmax.f32 %v1129, 0.0
        %v1146 = vmax.f32 %v1130, 0.0
        %v1147 = vsub.f32 %v758, 0.15
        %v1148 = vsub.f32 %v759, 0.15
        %v1149 = vsub.f32 %v760, 0.15
        %v1150 = vsub.f32 %v761, 0.15
        %v1151 = vsub.f32 %v762, 0.15
        %v1152 = vsub.f32 %v763, 0.15
        %v1153 = vsub.f32 %v764, 0.15
        %v1154 = vsub.f32 %v765, 0.15
        %v1155 = vsub.f32 %v766, 0.15
        %v1156 = vsub.f32 %v767, 0.15
        %v1157 = vsub.f32 %v768, 0.15
        %v1158 = vsub.f32 %v769, 0.15
        %v1159 = vsub.f32 %v770, 0.15
        %v1160 = vsub.f32 %v771, 0.15
        %v1161 = vsub.f32 %v772, 0.15
        %v1162 = vsub.f32 %v773, 0.15
        %v1163 = vmul.f32 %v1131, %v1147
        %v1164 = vmul.f32 %v1132, %v1148
        %v1165 = vmul.f32 %v1133, %v1149
        %v1166 = vmul.f32 %v1134, %v1150
        %v1167 = vmul.f32 %v1135, %v1151
        %v1168 = vmul.f32 %v1136, %v1152
        %v1169 = vmul.f32 %v1137, %v1153
        %v1170 = vmul.f32 %v1138, %v1154
        %v1171 = vmul.f32 %v1139, %v1155
        %v1172 = vmul.f32 %v1140, %v1156
        %v1173 = vmul.f32 %v1141, %v1157
        %v1174 = vmul.f32 %v1142, %v1158
        %v1175 = vmul.f32 %v1143, %v1159
        %v1176 = vmul.f32 %v1144, %v1160
        %v1177 = vmul.f32 %v1145, %v1161
        %v1178 = vmul.f32 %v1146, %v1162
        %v1179 = vstv %s321
        %v1180 = vmul.f32 %v1163, %v1179
        %v1181 = vmul.f32 %v1164, %v1179
        %v1182 = vmul.f32 %v1165, %v1179
        %v1183 = vmul.f32 %v1166, %v1179
        %v1184 = vmul.f32 %v1167, %v1179
        %v1185 = vmul.f32 %v1168, %v1179
        %v1186 = vmul.f32 %v1169, %v1179
        %v1187 = vmul.f32 %v1170, %v1179
        %v1188 = vmul.f32 %v1171, %v1179
        %v1189 = vmul.f32 %v1172, %v1179
        %v1190 = vmul.f32 %v1173, %v1179
        %v1191 = vmul.f32 %v1174, %v1179
        %v1192 = vmul.f32 %v1175, %v1179
        %v1193 = vmul.f32 %v1176, %v1179
        %v1194 = vmul.f32 %v1177, %v1179
        %v1195 = vmul.f32 %v1178, %v1179
        %1212 = vset.pattern.permute.xlu0 0
        %1213 = vperm.xlu0 %1212, %v1180
        %v1214 = vpop.permute.xlu0 %1213
        %1215 = vset.pattern.permute.xlu0 0
        %1216 = vperm.xlu0 %1215, %v1181
        %v1217 = vpop.permute.xlu0 %1216
        %1218 = vset.pattern.permute.xlu0 0
        %1219 = vperm.xlu0 %1218, %v1182
        %v1220 = vpop.permute.xlu0 %1219
        %1221 = vset.pattern.permute.xlu0 0
        %1222 = vperm.xlu0 %1221, %v1183
        %v1223 = vpop.permute.xlu0 %1222
        %1224 = vset.pattern.permute.xlu0 0
        %1225 = vperm.xlu0 %1224, %v1184
        %v1226 = vpop.permute.xlu0 %1225
        %1227 = vset.pattern.permute.xlu0 0
        %1228 = vperm.xlu0 %1227, %v1185
        %v1229 = vpop.permute.xlu0 %1228
        %1230 = vset.pattern.permute.xlu0 0
        %1231 = vperm.xlu0 %1230, %v1186
        %v1232 = vpop.permute.xlu0 %1231
        %1233 = vset.pattern.permute.xlu0 0
        %1234 = vperm.xlu0 %1233, %v1187
        %v1235 = vpop.permute.xlu0 %1234
        %1236 = vset.pattern.permute.xlu0 0
        %1237 = vperm.xlu0 %1236, %v1188
        %v1238 = vpop.permute.xlu0 %1237
        %1239 = vset.pattern.permute.xlu0 0
        %1240 = vperm.xlu0 %1239, %v1189
        %v1241 = vpop.permute.xlu0 %1240
        %1242 = vset.pattern.permute.xlu0 0
        %1243 = vperm.xlu0 %1242, %v1190
        %v1244 = vpop.permute.xlu0 %1243
        %1245 = vset.pattern.permute.xlu0 0
        %1246 = vperm.xlu0 %1245, %v1191
        %v1247 = vpop.permute.xlu0 %1246
        %1248 = vset.pattern.permute.xlu0 0
        %1249 = vperm.xlu0 %1248, %v1192
        %v1250 = vpop.permute.xlu0 %1249
        %1251 = vset.pattern.permute.xlu0 0
        %1252 = vperm.xlu0 %1251, %v1193
        %v1253 = vpop.permute.xlu0 %1252
        %1254 = vset.pattern.permute.xlu0 0
        %1255 = vperm.xlu0 %1254, %v1194
        %v1256 = vpop.permute.xlu0 %1255
        %1257 = vset.pattern.permute.xlu0 0
        %1258 = vperm.xlu0 %1257, %v1195
        %v1259 = vpop.permute.xlu0 %1258
        %v1260 = vlaneseq
        %v1261 = vshrl.u32 %v1260, 7
        %v1262 = vsub.s32 %v920, %v1261
        %v1263 = vrot.slane %v1214, %v1262
        %v1264 = vadd.s32 %v920, 4294967288
        %v1265 = vlaneseq
        %v1266 = vshrl.u32 %v1265, 7
        %v1267 = vsub.s32 %v1264, %v1266
        %v1268 = vrot.slane %v1217, %v1267
        %vm1269 = vcmask 130112
        %v1270 = vsel %vm1269, %v1268, %v1263
        %v1271 = vlaneseq
        %v1272 = vshrl.u32 %v1271, 7
        %v1273 = vsub.s32 %v920, %v1272
        %v1274 = vrot.slane %v1220, %v1273
        %v1275 = vlaneseq
        %v1276 = vshrl.u32 %v1275, 7
        %v1277 = vsub.s32 %v1264, %v1276
        %v1278 = vrot.slane %v1223, %v1277
        %v1279 = vsel %vm1269, %v1278, %v1274
        %v1280 = vlaneseq
        %v1281 = vshrl.u32 %v1280, 7
        %v1282 = vsub.s32 %v920, %v1281
        %v1283 = vrot.slane %v1226, %v1282
        %v1284 = vlaneseq
        %v1285 = vshrl.u32 %v1284, 7
        %v1286 = vsub.s32 %v1264, %v1285
        %v1287 = vrot.slane %v1229, %v1286
        %v1288 = vsel %vm1269, %v1287, %v1283
        %v1289 = vlaneseq
        %v1290 = vshrl.u32 %v1289, 7
        %v1291 = vsub.s32 %v920, %v1290
        %v1292 = vrot.slane %v1232, %v1291
        %v1293 = vlaneseq
        %v1294 = vshrl.u32 %v1293, 7
        %v1295 = vsub.s32 %v1264, %v1294
        %v1296 = vrot.slane %v1235, %v1295
        %v1297 = vsel %vm1269, %v1296, %v1292
        %v1298 = vlaneseq
        %v1299 = vshrl.u32 %v1298, 7
        %v1300 = vsub.s32 %v920, %v1299
        %v1301 = vrot.slane %v1238, %v1300
        %v1302 = vlaneseq
        %v1303 = vshrl.u32 %v1302, 7
        %v1304 = vsub.s32 %v1264, %v1303
        %v1305 = vrot.slane %v1241, %v1304
        %v1306 = vsel %vm1269, %v1305, %v1301
        %v1307 = vlaneseq
        %v1308 = vshrl.u32 %v1307, 7
        %v1309 = vsub.s32 %v920, %v1308
        %v1310 = vrot.slane %v1244, %v1309
        %v1311 = vlaneseq
        %v1312 = vshrl.u32 %v1311, 7
        %v1313 = vsub.s32 %v1264, %v1312
        %v1314 = vrot.slane %v1247, %v1313
        %v1315 = vsel %vm1269, %v1314, %v1310
        %v1316 = vlaneseq
        %v1317 = vshrl.u32 %v1316, 7
        %v1318 = vsub.s32 %v920, %v1317
        %v1319 = vrot.slane %v1250, %v1318
        %v1320 = vlaneseq
        %v1321 = vshrl.u32 %v1320, 7
        %v1322 = vsub.s32 %v1264, %v1321
        %v1323 = vrot.slane %v1253, %v1322
        %v1324 = vsel %vm1269, %v1323, %v1319
        %v1325 = vlaneseq
        %v1326 = vshrl.u32 %v1325, 7
        %v1327 = vsub.s32 %v920, %v1326
        %v1328 = vrot.slane %v1256, %v1327
        %v1329 = vlaneseq
        %v1330 = vshrl.u32 %v1329, 7
        %v1331 = vsub.s32 %v1264, %v1330
        %v1332 = vrot.slane %v1259, %v1331
        %v1333 = vsel %vm1269, %v1332, %v1328
        %v1334 = vsel %vm953, %v1279, %v1270
        %v1335 = vsel %vm955, %v1288, %v1334
        %v1336 = vsel %vm957, %v1297, %v1335
        %v1337 = vsel %vm959, %v1306, %v1336
        %v1338 = vsel %vm961, %v1315, %v1337
        %v1339 = vsel %vm963, %v1324, %v1338
        %v1340 = vsel %vm965, %v1333, %v1339
        %vm1342 = vcmask 130048
        %v1343 = vsel %vm1342, %v1340, -inf
        %1344 = vmax.xlane.f32.xlu0 %v1343
        %v1345 = vpop.xlane.xlu0 %1344
        %v1347 = vlaneseq
        %v1348 = vshrl.u32 %v1347, 7
        %v1349 = vsub.s32 0, %v1348
        %v1350 = vrot.slane %v1345, %v1349
        %v1351 = vlaneseq
        %v1352 = vshrl.u32 %v1351, 7
        %v1353 = vsub.s32 1, %v1352
        %v1354 = vrot.slane %v1345, %v1353
        %v1355 = vlaneseq
        %v1356 = vshrl.u32 %v1355, 7
        %v1357 = vsub.s32 2, %v1356
        %v1358 = vrot.slane %v1345, %v1357
        %v1359 = vlaneseq
        %v1360 = vshrl.u32 %v1359, 7
        %v1361 = vsub.s32 3, %v1360
        %v1362 = vrot.slane %v1345, %v1361
        %v1363 = vlaneseq
        %v1364 = vshrl.u32 %v1363, 7
        %v1365 = vsub.s32 4, %v1364
        %v1366 = vrot.slane %v1345, %v1365
        %v1367 = vlaneseq
        %v1368 = vshrl.u32 %v1367, 7
        %v1369 = vsub.s32 5, %v1368
        %v1370 = vrot.slane %v1345, %v1369
        %v1371 = vlaneseq
        %v1372 = vshrl.u32 %v1371, 7
        %v1373 = vsub.s32 6, %v1372
        %v1374 = vrot.slane %v1345, %v1373
        %v1375 = vlaneseq
        %v1376 = vshrl.u32 %v1375, 7
        %v1377 = vsub.s32 7, %v1376
        %v1378 = vrot.slane %v1345, %v1377
        %v1387 = vsub.f32 %v1180, %v1350
        %v1388 = vsub.f32 %v1181, %v1350
        %v1389 = vsub.f32 %v1182, %v1354
        %v1390 = vsub.f32 %v1183, %v1354
        %v1391 = vsub.f32 %v1184, %v1358
        %v1392 = vsub.f32 %v1185, %v1358
        %v1393 = vsub.f32 %v1186, %v1362
        %v1394 = vsub.f32 %v1187, %v1362
        %v1395 = vsub.f32 %v1188, %v1366
        %v1396 = vsub.f32 %v1189, %v1366
        %v1397 = vsub.f32 %v1190, %v1370
        %v1398 = vsub.f32 %v1191, %v1370
        %v1399 = vsub.f32 %v1192, %v1374
        %v1400 = vsub.f32 %v1193, %v1374
        %v1401 = vsub.f32 %v1194, %v1378
        %v1402 = vsub.f32 %v1195, %v1378
        %v1403 = vmul.f32 %v1387, 1.442695
        %v1404 = vpow.pop %v1403
        %v1405 = vmul.f32 %v1388, 1.442695
        %v1406 = vpow.pop %v1405
        %v1407 = vmul.f32 %v1389, 1.442695
        %v1408 = vpow.pop %v1407
        %v1409 = vmul.f32 %v1390, 1.442695
        %v1410 = vpow.pop %v1409
        %v1411 = vmul.f32 %v1391, 1.442695
        %v1412 = vpow.pop %v1411
        %v1413 = vmul.f32 %v1392, 1.442695
        %v1414 = vpow.pop %v1413
        %v1415 = vmul.f32 %v1393, 1.442695
        %v1416 = vpow.pop %v1415
        %v1417 = vmul.f32 %v1394, 1.442695
        %v1418 = vpow.pop %v1417
        %v1419 = vmul.f32 %v1395, 1.442695
        %v1420 = vpow.pop %v1419
        %v1421 = vmul.f32 %v1396, 1.442695
        %v1422 = vpow.pop %v1421
        %v1423 = vmul.f32 %v1397, 1.442695
        %v1424 = vpow.pop %v1423
        %v1425 = vmul.f32 %v1398, 1.442695
        %v1426 = vpow.pop %v1425
        %v1427 = vmul.f32 %v1399, 1.442695
        %v1428 = vpow.pop %v1427
        %v1429 = vmul.f32 %v1400, 1.442695
        %v1430 = vpow.pop %v1429
        %v1431 = vmul.f32 %v1401, 1.442695
        %v1432 = vpow.pop %v1431
        %v1433 = vmul.f32 %v1402, 1.442695
        %v1434 = vpow.pop %v1433
        %1451 = vset.pattern.permute.xlu0 0
        %1452 = vperm.xlu0 %1451, %v1404
        %v1453 = vpop.permute.xlu0 %1452
        %1454 = vset.pattern.permute.xlu0 0
        %1455 = vperm.xlu0 %1454, %v1406
        %v1456 = vpop.permute.xlu0 %1455
        %1457 = vset.pattern.permute.xlu0 0
        %1458 = vperm.xlu0 %1457, %v1408
        %v1459 = vpop.permute.xlu0 %1458
        %1460 = vset.pattern.permute.xlu0 0
        %1461 = vperm.xlu0 %1460, %v1410
        %v1462 = vpop.permute.xlu0 %1461
        %1463 = vset.pattern.permute.xlu0 0
        %1464 = vperm.xlu0 %1463, %v1412
        %v1465 = vpop.permute.xlu0 %1464
        %1466 = vset.pattern.permute.xlu0 0
        %1467 = vperm.xlu0 %1466, %v1414
        %v1468 = vpop.permute.xlu0 %1467
        %1469 = vset.pattern.permute.xlu0 0
        %1470 = vperm.xlu0 %1469, %v1416
        %v1471 = vpop.permute.xlu0 %1470
        %1472 = vset.pattern.permute.xlu0 0
        %1473 = vperm.xlu0 %1472, %v1418
        %v1474 = vpop.permute.xlu0 %1473
        %1475 = vset.pattern.permute.xlu0 0
        %1476 = vperm.xlu0 %1475, %v1420
        %v1477 = vpop.permute.xlu0 %1476
        %1478 = vset.pattern.permute.xlu0 0
        %1479 = vperm.xlu0 %1478, %v1422
        %v1480 = vpop.permute.xlu0 %1479
        %1481 = vset.pattern.permute.xlu0 0
        %1482 = vperm.xlu0 %1481, %v1424
        %v1483 = vpop.permute.xlu0 %1482
        %1484 = vset.pattern.permute.xlu0 0
        %1485 = vperm.xlu0 %1484, %v1426
        %v1486 = vpop.permute.xlu0 %1485
        %1487 = vset.pattern.permute.xlu0 0
        %1488 = vperm.xlu0 %1487, %v1428
        %v1489 = vpop.permute.xlu0 %1488
        %1490 = vset.pattern.permute.xlu0 0
        %1491 = vperm.xlu0 %1490, %v1430
        %v1492 = vpop.permute.xlu0 %1491
        %1493 = vset.pattern.permute.xlu0 0
        %1494 = vperm.xlu0 %1493, %v1432
        %v1495 = vpop.permute.xlu0 %1494
        %1496 = vset.pattern.permute.xlu0 0
        %1497 = vperm.xlu0 %1496, %v1434
        %v1498 = vpop.permute.xlu0 %1497
        %v1499 = vlaneseq
        %v1500 = vshrl.u32 %v1499, 7
        %v1501 = vsub.s32 %v920, %v1500
        %v1502 = vrot.slane %v1453, %v1501
        %v1503 = vlaneseq
        %v1504 = vshrl.u32 %v1503, 7
        %v1505 = vsub.s32 %v1264, %v1504
        %v1506 = vrot.slane %v1456, %v1505
        %v1507 = vsel %vm1269, %v1506, %v1502
        %v1508 = vlaneseq
        %v1509 = vshrl.u32 %v1508, 7
        %v1510 = vsub.s32 %v920, %v1509
        %v1511 = vrot.slane %v1459, %v1510
        %v1512 = vlaneseq
        %v1513 = vshrl.u32 %v1512, 7
        %v1514 = vsub.s32 %v1264, %v1513
        %v1515 = vrot.slane %v1462, %v1514
        %v1516 = vsel %vm1269, %v1515, %v1511
        %v1517 = vlaneseq
        %v1518 = vshrl.u32 %v1517, 7
        %v1519 = vsub.s32 %v920, %v1518
        %v1520 = vrot.slane %v1465, %v1519
        %v1521 = vlaneseq
        %v1522 = vshrl.u32 %v1521, 7
        %v1523 = vsub.s32 %v1264, %v1522
        %v1524 = vrot.slane %v1468, %v1523
        %v1525 = vsel %vm1269, %v1524, %v1520
        %v1526 = vlaneseq
        %v1527 = vshrl.u32 %v1526, 7
        %v1528 = vsub.s32 %v920, %v1527
        %v1529 = vrot.slane %v1471, %v1528
        %v1530 = vlaneseq
        %v1531 = vshrl.u32 %v1530, 7
        %v1532 = vsub.s32 %v1264, %v1531
        %v1533 = vrot.slane %v1474, %v1532
        %v1534 = vsel %vm1269, %v1533, %v1529
        %v1535 = vlaneseq
        %v1536 = vshrl.u32 %v1535, 7
        %v1537 = vsub.s32 %v920, %v1536
        %v1538 = vrot.slane %v1477, %v1537
        %v1539 = vlaneseq
        %v1540 = vshrl.u32 %v1539, 7
        %v1541 = vsub.s32 %v1264, %v1540
        %v1542 = vrot.slane %v1480, %v1541
        %v1543 = vsel %vm1269, %v1542, %v1538
        %v1544 = vlaneseq
        %v1545 = vshrl.u32 %v1544, 7
        %v1546 = vsub.s32 %v920, %v1545
        %v1547 = vrot.slane %v1483, %v1546
        %v1548 = vlaneseq
        %v1549 = vshrl.u32 %v1548, 7
        %v1550 = vsub.s32 %v1264, %v1549
        %v1551 = vrot.slane %v1486, %v1550
        %v1552 = vsel %vm1269, %v1551, %v1547
        %v1553 = vlaneseq
        %v1554 = vshrl.u32 %v1553, 7
        %v1555 = vsub.s32 %v920, %v1554
        %v1556 = vrot.slane %v1489, %v1555
        %v1557 = vlaneseq
        %v1558 = vshrl.u32 %v1557, 7
        %v1559 = vsub.s32 %v1264, %v1558
        %v1560 = vrot.slane %v1492, %v1559
        %v1561 = vsel %vm1269, %v1560, %v1556
        %v1562 = vlaneseq
        %v1563 = vshrl.u32 %v1562, 7
        %v1564 = vsub.s32 %v920, %v1563
        %v1565 = vrot.slane %v1495, %v1564
        %v1566 = vlaneseq
        %v1567 = vshrl.u32 %v1566, 7
        %v1568 = vsub.s32 %v1264, %v1567
        %v1569 = vrot.slane %v1498, %v1568
        %v1570 = vsel %vm1269, %v1569, %v1565
        %v1571 = vsel %vm953, %v1516, %v1507
        %v1572 = vsel %vm955, %v1525, %v1571
        %v1573 = vsel %vm957, %v1534, %v1572
        %v1574 = vsel %vm959, %v1543, %v1573
        %v1575 = vsel %vm961, %v1552, %v1574
        %v1576 = vsel %vm963, %v1561, %v1575
        %v1577 = vsel %vm965, %v1570, %v1576
        %v1579 = vsel %vm1342, %v1577, 0.0
        %1580 = vadd.xlane.f32.xlu0 %v1579
        %v1581 = vpop.xlane.xlu0 %1580
        %v1582 = vlog2.pop %v1581
        %v1583 = vmul.f32 %v1582, 0.6931472
        %v1584 = vadd.f32 %v1345, %v1583
        %v1585 = vadd.f32 %v1114, %v1584
        %v1586 = vmax.f32 %v1585, 0.0
        %v1587 = vand.u32 2147483647, %v1585
        %v1588 = vsub.f32 0.0, %v1587
        %v1589 = vmul.f32 %v1588, 1.442695
        %v1590 = vpow.pop %v1589
        %v1591 = vadd.f32 %v1590, 1.0
        %v1592 = vlog2.pop %v1591
        %v1593 = vmul.f32 %v1592, 0.6931472
        %v1594 = vmul.f32 -0.5, %v1590
        %v1595 = vadd.f32 %v1594, 1.0
        %v1596 = vmul.f32 %v1595, %v1590
        %v1597 = vand.u32 2147483647, %v1590
        %vm1598 = vcmp.lt.f32.partialorder %v1597, 0.0004427343
        %v1599 = vsel %vm1598, %v1596, %v1593
        %v1600 = vadd.f32 %v1586, %v1599
        %1601 = vst [vmem:[%s320] sm:$0xff] %v1600
        %p1602 = scmp.lt.s32.totalorder %s23, 1
        %s1603 = scalar_select %p1602, %s23, 1
        %s1604 = smul.addr %s1603, 8
        %s1605 = scalar_lea.vmem %s5, %s1604
        // Predicated region
        $region49: #{circle_loss3.1} parent=39 // pred_check
          %p1606 = pneg %p166
        $region50: #{circle_loss3.1} parent=39 // pred_check_branch
          %1608 = sbr.rel (%p1606) target = $region52
        $region51: #{circle_loss3.1} parent=39 // pred_region
          _
        $region52: #{circle_loss3.1} parent=39 // pred_fallthru
          _
      $region40: #{circle_loss3.1} parent=5 // pred_fallthru
        _
      %p1609 = scmp.le.s32.totalorder 2, %s18
      // Predicated region
      $region53: #{circle_loss3.1} parent=5 // pred_check
        %p1610 = pneg %p1609
      $region54: #{circle_loss3.1} parent=5 // pred_check_branch
        %1612 = sbr.rel (%p1610) target = $region56
      $region55: #{circle_loss3.1} parent=5 // pred_region
        %s1613 = ssub.s32 %s18, 2
        // Predicated region
        $region57: #{circle_loss3.1} parent=55 // pred_check
          %p1614 = pneg %p172
        $region58: #{circle_loss3.1} parent=55 // pred_check_branch
          %1616 = sbr.rel (%p1614) target = $region60
        $region59: #{circle_loss3.1} parent=55 // pred_region
          %p1617 = scmp.lt.s32.totalorder %s24, 1
          %s1618 = scalar_select %p1617, %s24, 1
          %s1619 = smul.addr %s1618, 8
          %s1620 = scalar_lea.vmem %s5, %s1619
        $region60: #{circle_loss3.1} parent=55 // pred_fallthru
          _
      $region56: #{circle_loss3.1} parent=5 // pred_fallthru
        _
    $region6: #{circle_loss3.1} parent=1 // loop_footer
      %s22 = sadd.s32 1, %s18
    $region7: #{circle_loss3.1} parent=1 // loop_footer_branch
      %17 = sbr.rel target = $region3
    $region8: #{circle_loss3.1} parent=1 // loop_exit
      _
    %1621 = vsyncpa [#allocation4], 1
    %s1622 = scalar_lea.sflag [#allocation4], 1
    %1623 = vsyncpa %s1622, 1
    %1624 = vsyncpa [#allocation6], 1
    %s1625 = scalar_lea.sflag [#allocation6], 1
    %1626 = vsyncpa %s1625, 1

</llo_original>
